<compile_context>
chip_gen: v6e
topology: v6e:2x2x1
jax: 0.10.0
libtpu: 0.0.40
codegen_flags: <defaults>
</compile_context>

<pallas_src>
import functools
import math

import jax
import jax.numpy as jnp
from jax import lax
from jax.experimental import pallas as pl
from jax.experimental.pallas import tpu as pltpu

_MIB = 1024 * 1024
_SQRT_HALF = 0.7071067811865476


def _vmem_capacity_bytes():
    try:
        return int(pltpu.get_tpu_info().vmem_capacity_bytes)
    except Exception:
        return 64 * _MIB  # conservative (v7x-sized) default


_VMEM_CAPACITY = _vmem_capacity_bytes()
_BIG_VMEM = _VMEM_CAPACITY >= 96 * _MIB   # v5e / v6e (128 MiB) vs v7x (64 MiB)
_DEFAULT_VMEM_LIMIT = 32 * _MIB           # safe on every generation
_LARGE_VMEM_LIMIT = 64 * _MIB if _BIG_VMEM else 32 * _MIB


def _gelu_erf(x):
    # Exact (erf-based) GELU, matching transformers' ACT2FN["gelu"].
    return x * 0.5 * (1.0 + lax.erf(x * _SQRT_HALF))


def _pick_tile(dim, candidates=(512, 384, 256, 128)):
    """Full dim when small; otherwise the largest MXU/lane-friendly divisor; else padded."""
    if dim <= candidates[0]:
        return dim
    for c in candidates:
        if dim % c == 0:
            return c
    return candidates[0]


def _resident_spec(block_shape, index_map):
    """BlockSpec for a grid-invariant (constant index_map) operand.

    Single-buffered (pl.Buffered(1)): an invariant block never needs a second pipeline
    buffer, which matters most on v7x's 64 MiB VMEM.  Falls back to a plain BlockSpec
    if this Pallas version does not accept pipeline_mode.
    """
    try:
        return pl.BlockSpec(block_shape, index_map, pipeline_mode=pl.Buffered(1))
    except Exception:
        return pl.BlockSpec(block_shape, index_map)


def _heads_per_block(num_heads, head_dim):
    """Smallest head group whose lane width is a multiple of 128 (unmasked stores);
    falls back to all heads (block == full hidden dim) for tiny configs."""
    for hp in range(1, num_heads + 1):
        if num_heads % hp == 0 and (hp * head_dim) % 128 == 0:
            return hp
    return num_heads


# ---------------------------------------------------------------------------
# Kernel 1: fused QKV projection.  1-D grid over M, fused weight VMEM-resident,
# q/k/v written as three (M, H) outputs in the compute dtype.
# ---------------------------------------------------------------------------
def _dense_qkv_kernel(x_ref, w_ref, b_ref, q_ref, k_ref, v_ref):
    x = x_ref[...].astype(w_ref.dtype)                      # bf16 (or f32) MXU inputs
    y = jnp.dot(x, w_ref[...], preferred_element_type=jnp.float32)   # [tm, 3H] f32 acc
    y = y + b_ref[...].astype(jnp.float32)
    h = q_ref.shape[-1]
    q_ref[...] = y[:, :h].astype(q_ref.dtype)
    k_ref[...] = y[:, h:2 * h].astype(k_ref.dtype)
    v_ref[...] = y[:, 2 * h:].astype(v_ref.dtype)


def dense_qkv(x2d, w_qkv, b_qkv, *, vmem_limit_bytes=_DEFAULT_VMEM_LIMIT):
    M, K = x2d.shape
    _, N3 = w_qkv.shape
    H = N3 // 3
    tm = _pick_tile(M)
    out_dtype = w_qkv.dtype                                  # compute dtype (bf16 fast path)
    cost = pl.CostEstimate(
        flops=2 * M * N3 * K,
        transcendentals=0,
        bytes_accessed=int(M * K * x2d.dtype.itemsize + K * N3 * w_qkv.dtype.itemsize
                           + N3 * 4 + 3 * M * H * jnp.dtype(out_dtype).itemsize),
    )
    return pl.pallas_call(
        _dense_qkv_kernel,
        out_shape=(jax.ShapeDtypeStruct((M, H), out_dtype),
                   jax.ShapeDtypeStruct((M, H), out_dtype),
                   jax.ShapeDtypeStruct((M, H), out_dtype)),
        grid_spec=pltpu.PrefetchScalarGridSpec(
            num_scalar_prefetch=0,
            grid=(pl.cdiv(M, tm),),
            in_specs=[
                pl.BlockSpec((tm, K), lambda i: (i, 0)),
                _resident_spec((K, N3), lambda i: (0, 0)),   # fused QKV weight resident
                _resident_spec((1, N3), lambda i: (0, 0)),
            ],
            out_specs=[pl.BlockSpec((tm, H), lambda i: (i, 0)),
                       pl.BlockSpec((tm, H), lambda i: (i, 0)),
                       pl.BlockSpec((tm, H), lambda i: (i, 0))],
        ),
        compiler_params=pltpu.CompilerParams(
            dimension_semantics=("parallel",),
            vmem_limit_bytes=vmem_limit_bytes,
        ),
        cost_estimate=cost,
    )(x2d, w_qkv, b_qkv.reshape(1, N3))


# ---------------------------------------------------------------------------
# Kernel 2: attention core.  Grid (batch, head-group); per-head softmax(QK^T/sqrt(d)+mask)@V.
# Reads/writes q/k/v/ctx directly in (B, S, H) layout (no head transposes in HBM).
# Scale folded into q, deferred normalization on the [S, dh] result.
# TODO(synk): switch to a flash-attention (online-softmax, KV-tiled) kernel for long S;
#             the full [S, S] f32 score block is fine for BERT-style S<=512 but not S>=2048.
# ---------------------------------------------------------------------------
def _attention_kernel(q_ref, k_ref, v_ref, m_ref, o_ref, *, scale, head_dim,
                      heads_per_block, approx_recip):
    mask = m_ref[...].astype(jnp.float32)                    # [1, S] additive mask
    q = q_ref[...]
    k = k_ref[...]
    v = v_ref[...]
    outs = []
    for h in range(heads_per_block):
        lo, hi = h * head_dim, (h + 1) * head_dim
        qh = q[:, lo:hi] * scale                             # fold 1/sqrt(dh): O(S*dh) work
        kh = k[:, lo:hi]
        vh = v[:, lo:hi]
        s = lax.dot_general(qh, kh, (((1,), (1,)), ((), ())),
                            preferred_element_type=jnp.float32)       # [S, S] f32
        s = s + mask
        s = s - jnp.max(s, axis=-1, keepdims=True)
        p = jnp.exp(s)                                                # f32
        denom = jnp.sum(p, axis=-1, keepdims=True)                    # f32 row sum
        ctx = jnp.dot(p.astype(vh.dtype), vh,
                      preferred_element_type=jnp.float32)             # [S, dh]
        if approx_recip:
            ctx = ctx * pl.reciprocal(denom, approx=True)             # EUP slot, ~free
        else:
            ctx = ctx / denom                                         # exact for f32 path
        outs.append(ctx)
    out = outs[0] if len(outs) == 1 else jnp.concatenate(outs, axis=-1)
    o_ref[...] = out.astype(o_ref.dtype)


def attention_fused(q, k, v, mask2d, *, num_heads, vmem_limit_bytes=_DEFAULT_VMEM_LIMIT):
    # q, k, v: [B, S, H]; head h occupies columns [h*dh, (h+1)*dh).  mask2d: [B, S] additive.
    B, S, H = q.shape
    dh = H // num_heads
    hp = _heads_per_block(num_heads, dh)
    ng = num_heads // hp
    scale = 1.0 / math.sqrt(dh)
    mask3d = mask2d.reshape(B, 1, S).astype(jnp.float32)
    approx = jnp.dtype(q.dtype) == jnp.dtype(jnp.bfloat16)
    kernel = functools.partial(_attention_kernel, scale=scale, head_dim=dh,
                               heads_per_block=hp, approx_recip=approx)
    blk = (None, S, hp * dh)
    cost = pl.CostEstimate(
        flops=4 * B * num_heads * S * S * dh,
        transcendentals=B * num_heads * S * S,
        bytes_accessed=int(4 * B * S * H * q.dtype.itemsize + B * S * 4),
    )
    return pl.pallas_call(
        kernel,
        out_shape=jax.ShapeDtypeStruct((B, S, H), q.dtype),
        grid_spec=pltpu.PrefetchScalarGridSpec(
            num_scalar_prefetch=0,
            grid=(B, ng),
            in_specs=[
                pl.BlockSpec(blk, lambda b, g: (b, 0, g)),
                pl.BlockSpec(blk, lambda b, g: (b, 0, g)),
                pl.BlockSpec(blk, lambda b, g: (b, 0, g)),
                pl.BlockSpec((None, 1, S), lambda b, g: (b, 0, 0)),
            ],
            out_specs=pl.BlockSpec(blk, lambda b, g: (b, 0, g)),
        ),
        compiler_params=pltpu.CompilerParams(
            dimension_semantics=("parallel", "parallel"),
            vmem_limit_bytes=vmem_limit_bytes,
        ),
        cost_estimate=cost,
    )(q, k, v, mask3d)


# ---------------------------------------------------------------------------
# Kernel 3: dense + bias + residual + LayerNorm (BertSelfOutput, dropout = identity).
# ---------------------------------------------------------------------------
def _dense_residual_ln_kernel(x_ref, res_ref, w_ref, b_ref, g_ref, bt_ref, o_ref, *, eps):
    y = jnp.dot(x_ref[...].astype(w_ref.dtype), w_ref[...],
                preferred_element_type=jnp.float32)
    y = y + b_ref[...].astype(jnp.float32) + res_ref[...].astype(jnp.float32)
    mu = jnp.mean(y, axis=-1, keepdims=True)
    var = jnp.mean(jnp.square(y - mu), axis=-1, keepdims=True)
    yn = (y - mu) * lax.rsqrt(var + eps)
    o_ref[...] = (yn * g_ref[...].astype(jnp.float32)
                  + bt_ref[...].astype(jnp.float32)).astype(o_ref.dtype)


def dense_residual_ln(x2d, res2d, w, b, gamma, beta, *, eps,
                      vmem_limit_bytes=_DEFAULT_VMEM_LIMIT):
    M, K = x2d.shape
    _, N = w.shape
    tm = _pick_tile(M)
    kernel = functools.partial(_dense_residual_ln_kernel, eps=eps)
    cost = pl.CostEstimate(
        flops=2 * M * N * K + 10 * M * N,
        transcendentals=M,
        bytes_accessed=int(M * K * x2d.dtype.itemsize + M * N * res2d.dtype.itemsize
                           + K * N * w.dtype.itemsize + 3 * N * 4
                           + M * N * res2d.dtype.itemsize),
    )
    return pl.pallas_call(
        kernel,
        out_shape=jax.ShapeDtypeStruct((M, N), res2d.dtype),   # residual stream stays f32
        grid_spec=pltpu.PrefetchScalarGridSpec(
            num_scalar_prefetch=0,
            grid=(pl.cdiv(M, tm),),
            in_specs=[
                pl.BlockSpec((tm, K), lambda i: (i, 0)),
                pl.BlockSpec((tm, N), lambda i: (i, 0)),
                _resident_spec((K, N), lambda i: (0, 0)),       # weight resident across M
                _resident_spec((1, N), lambda i: (0, 0)),
                _resident_spec((1, N), lambda i: (0, 0)),
                _resident_spec((1, N), lambda i: (0, 0)),
            ],
            out_specs=pl.BlockSpec((tm, N), lambda i: (i, 0)),
        ),
        compiler_params=pltpu.CompilerParams(
            dimension_semantics=("parallel",),
            vmem_limit_bytes=vmem_limit_bytes,
        ),
        cost_estimate=cost,
    )(x2d, res2d, w, b.reshape(1, N), gamma.reshape(1, N), beta.reshape(1, N))


# ---------------------------------------------------------------------------
# Kernel 4: fused MLP — GELU(x@W1+b1) @ W2 + b2 + residual + LayerNorm.
# The [tm, I] intermediate activation lives only in VMEM (never written to HBM).
# ---------------------------------------------------------------------------
def _mlp_residual_ln_kernel(x_ref, w1_ref, b1_ref, w2_ref, b2_ref, g_ref, bt_ref,
                            o_ref, *, eps):
    x = x_ref[...]
    h = jnp.dot(x.astype(w1_ref.dtype), w1_ref[...],
                preferred_element_type=jnp.float32)
    h = _gelu_erf(h + b1_ref[...].astype(jnp.float32))
    y = jnp.dot(h.astype(w2_ref.dtype), w2_ref[...],
                preferred_element_type=jnp.float32)
    y = y + b2_ref[...].astype(jnp.float32) + x.astype(jnp.float32)
    mu = jnp.mean(y, axis=-1, keepdims=True)
    var = jnp.mean(jnp.square(y - mu), axis=-1, keepdims=True)
    yn = (y - mu) * lax.rsqrt(var + eps)
    o_ref[...] = (yn * g_ref[...].astype(jnp.float32)
                  + bt_ref[...].astype(jnp.float32)).astype(o_ref.dtype)


def mlp_residual_ln(x2d, w1, b1, w2, b2, gamma, beta, *, eps, vmem_limit_bytes=None):
    M, H = x2d.shape
    _, I = w1.shape
    if vmem_limit_bytes is None:
        vmem_limit_bytes = _LARGE_VMEM_LIMIT
    # v5e/v6e (128 MiB VMEM): large M tiles amortize per-step overhead / LN reductions.
    # v7x (64 MiB): keep tm <= 256 so resident bf16 W1/W2 + f32 [tm, I] intermediate fit.
    tm = _pick_tile(M, candidates=(512, 384, 256, 128) if _BIG_VMEM else (256, 128))
    # TODO(synk): for H>=1024 / I>=4096 on v7x, add an inner I-tile grid axis ("arbitrary")
    #             with a (tm, H) f32 accumulator scratch (GELU per I-tile, LN at last step).
    kernel = functools.partial(_mlp_residual_ln_kernel, eps=eps)
    cost = pl.CostEstimate(
        flops=4 * M * H * I + 10 * M * H,
        transcendentals=M * I + M,
        bytes_accessed=int(2 * M * H * x2d.dtype.itemsize
                           + H * I * w1.dtype.itemsize + I * H * w2.dtype.itemsize
                           + (I + 3 * H) * 4),
    )
    return pl.pallas_call(
        kernel,
        out_shape=jax.ShapeDtypeStruct((M, H), x2d.dtype),
        grid_spec=pltpu.PrefetchScalarGridSpec(
            num_scalar_prefetch=0,
            grid=(pl.cdiv(M, tm),),
            in_specs=[
                pl.BlockSpec((tm, H), lambda i: (i, 0)),
                _resident_spec((H, I), lambda i: (0, 0)),
                _resident_spec((1, I), lambda i: (0, 0)),
                _resident_spec((I, H), lambda i: (0, 0)),
                _resident_spec((1, H), lambda i: (0, 0)),
                _resident_spec((1, H), lambda i: (0, 0)),
                _resident_spec((1, H), lambda i: (0, 0)),
            ],
            out_specs=pl.BlockSpec((tm, H), lambda i: (i, 0)),
        ),
        compiler_params=pltpu.CompilerParams(
            dimension_semantics=("parallel",),
            vmem_limit_bytes=vmem_limit_bytes,
        ),
        cost_estimate=cost,
    )(x2d, w1, b1.reshape(1, I), w2, b2.reshape(1, H),
      gamma.reshape(1, H), beta.reshape(1, H))


# ---------------------------------------------------------------------------
# One-time weight preparation (OUTSIDE the per-call path): fuse [wq|wk|wv] / [bq|bk|bv]
# and pre-cast the matmul weights to the MXU compute dtype (bf16 by default).
# Biases and LayerNorm params stay f32 (added / applied in f32 inside the kernels).
# ---------------------------------------------------------------------------
def prepare_params(params, compute_dtype=jnp.bfloat16):
    cd = jnp.dtype(compute_dtype)
    f32 = jnp.float32
    return {
        "w_qkv": jnp.concatenate([params["wq"], params["wk"], params["wv"]], axis=1).astype(cd),
        "b_qkv": jnp.concatenate([params["bq"], params["bk"], params["bv"]]).astype(f32),
        "wo": params["wo"].astype(cd), "bo": params["bo"].astype(f32),
        "w1": params["w1"].astype(cd), "b1": params["b1"].astype(f32),
        "w2": params["w2"].astype(cd), "b2": params["b2"].astype(f32),
        "ln1_gamma": params["ln1_gamma"].astype(f32), "ln1_beta": params["ln1_beta"].astype(f32),
        "ln2_gamma": params["ln2_gamma"].astype(f32), "ln2_beta": params["ln2_beta"].astype(f32),
    }


# ---------------------------------------------------------------------------
# BertLayer forward (eval mode).  Linear weights stored transposed: y = x @ W + b.
# `prepared` comes from prepare_params(); its weight dtype is the MXU compute dtype.
# TODO(synk): head_mask / cross-attention (is_decoder) branches and train-mode dropout
#             are not implemented; dropout is identity in eval.
# ---------------------------------------------------------------------------
@functools.partial(jax.jit, static_argnames=("num_heads", "layer_norm_eps"))
def bert_layer(hidden_states, attention_mask, prepared, *, num_heads, layer_norm_eps=1e-12):
    B, S, H = hidden_states.shape
    M = B * S
    x2d = hidden_states.reshape(M, H)

    if attention_mask is None:
        attention_mask = jnp.zeros((B, S), dtype=jnp.float32)

    # --- self attention: fused QKV projection (resident weight), per-head attention ---
    q2d, k2d, v2d = dense_qkv(x2d, prepared["w_qkv"], prepared["b_qkv"])
    ctx = attention_fused(q2d.reshape(B, S, H), k2d.reshape(B, S, H), v2d.reshape(B, S, H),
                          attention_mask, num_heads=num_heads)      # [B, S, H], no transposes

    # --- BertSelfOutput: dense + residual + LayerNorm (fused) ---
    attn_out = dense_residual_ln(ctx.reshape(M, H), x2d,
                                 prepared["wo"], prepared["bo"],
                                 prepared["ln1_gamma"], prepared["ln1_beta"],
                                 eps=layer_norm_eps)

    # --- BertIntermediate + BertOutput fused: GELU MLP + residual + LayerNorm ---
    out2d = mlp_residual_ln(attn_out,
                            prepared["w1"], prepared["b1"],
                            prepared["w2"], prepared["b2"],
                            prepared["ln2_gamma"], prepared["ln2_beta"],
                            eps=layer_norm_eps)
    return out2d.reshape(B, S, H)


# ---------------------------------------------------------------------------
# Pure-JAX reference (same math, eval mode).
# ---------------------------------------------------------------------------
def _layer_norm_ref(x, g, b, eps):
    mu = jnp.mean(x, axis=-1, keepdims=True)
    var = jnp.mean(jnp.square(x - mu), axis=-1, keepdims=True)
    return (x - mu) / jnp.sqrt(var + eps) * g + b


def bert_layer_ref(hidden_states, attention_mask, params, *, num_heads,
                   layer_norm_eps=1e-12):
    B, S, H = hidden_states.shape
    nh = num_heads
    dh = H // nh

    def split_heads(t):
        return t.reshape(B, S, nh, dh).transpose(0, 2, 1, 3)

    q = split_heads(hidden_states @ params["wq"] + params["bq"])
    k = split_heads(hidden_states @ params["wk"] + params["bk"])
    v = split_heads(hidden_states @ params["wv"] + params["bv"])
    scores = jnp.einsum("bhqd,bhkd->bhqk", q, k) / math.sqrt(dh)
    if attention_mask is not None:
        scores = scores + attention_mask[:, None, None, :]
    probs = jax.nn.softmax(scores, axis=-1)
    ctx = jnp.einsum("bhqk,bhkd->bhqd", probs, v)
    ctx = ctx.transpose(0, 2, 1, 3).reshape(B, S, H)
    attn_out = _layer_norm_ref(ctx @ params["wo"] + params["bo"] + hidden_states,
                               params["ln1_gamma"], params["ln1_beta"], layer_norm_eps)
    h = attn_out @ params["w1"] + params["b1"]
    h = _gelu_erf(h)
    out = _layer_norm_ref(h @ params["w2"] + params["b2"] + attn_out,
                          params["ln2_gamma"], params["ln2_beta"], layer_norm_eps)
    return out


if __name__ == "__main__":
    # Small BERT-like config: hidden=32, heads=4 (head_size=8), intermediate=128.
    B, S, H, NH, I = 2, 8, 32, 4, 128
    EPS = 1e-12

    keys = jax.random.split(jax.random.PRNGKey(0), 14)

    def init_w(k, shape, fan_in):
        return jax.random.normal(k, shape, dtype=jnp.float32) * (1.0 / math.sqrt(fan_in))

    params = {
        "wq": init_w(keys[0], (H, H), H), "bq": jax.random.normal(keys[1], (H,)) * 0.02,
        "wk": init_w(keys[2], (H, H), H), "bk": jax.random.normal(keys[3], (H,)) * 0.02,
        "wv": init_w(keys[4], (H, H), H), "bv": jax.random.normal(keys[5], (H,)) * 0.02,
        "wo": init_w(keys[6], (H, H), H), "bo": jax.random.normal(keys[7], (H,)) * 0.02,
        "w1": init_w(keys[8], (H, I), H), "b1": jax.random.normal(keys[9], (I,)) * 0.02,
        "w2": init_w(keys[10], (I, H), I), "b2": jax.random.normal(keys[11], (H,)) * 0.02,
        "ln1_gamma": jnp.ones((H,), jnp.float32), "ln1_beta": jnp.zeros((H,), jnp.float32),
        "ln2_gamma": jnp.ones((H,), jnp.float32), "ln2_beta": jnp.zeros((H,), jnp.float32),
    }

    hidden_states = jax.random.normal(keys[12], (B, S, H), dtype=jnp.float32)
    # Additive attention mask [B, S]: last two positions of batch 1 are padding.
    valid = jnp.ones((B, S), jnp.float32).at[1, S - 2:].set(0.0)
    attention_mask = (1.0 - valid) * -10000.0

    ref = bert_layer_ref(hidden_states, attention_mask, params, num_heads=NH,
                         layer_norm_eps=EPS)

    # f32 compute path (tight correctness check against the pure-JAX reference).
    prepared_f32 = prepare_params(params, compute_dtype=jnp.float32)
    out_f32 = bert_layer(hidden_states, attention_mask, prepared_f32, num_heads=NH,
                         layer_norm_eps=EPS)
    jax.block_until_ready(out_f32)
    assert out_f32.shape == (B, S, H)
    max_err = float(jnp.max(jnp.abs(out_f32 - ref)))
    assert jnp.allclose(out_f32, ref, atol=1e-3, rtol=1e-3), f"f32 max err {max_err}"

    # bf16 MXU path (f32 accumulation) — the default fast path on v5e/v6e/v7x.
    prepared_bf16 = prepare_params(params)  # default compute_dtype = bf16
    out_bf16 = bert_layer(hidden_states, attention_mask, prepared_bf16, num_heads=NH,
                          layer_norm_eps=EPS)
    jax.block_until_ready(out_bf16)
    assert jnp.allclose(out_bf16, ref, atol=2e-1, rtol=1e-1)

    print("KERNEL_OK")
</pallas_src>

<mosaic_0001>
module attributes {stable_mosaic.version = 11 : i64} {
  func.func @_attention_kernel(%arg0: i32, %arg1: i32, %arg2: memref<1x8x32xf32, #tpu.memory_space<vmem>>, %arg3: memref<1x8x32xf32, #tpu.memory_space<vmem>>, %arg4: memref<1x8x32xf32, #tpu.memory_space<vmem>>, %arg5: memref<1x1x8xf32, #tpu.memory_space<vmem>>, %arg6: memref<1x8x32xf32, #tpu.memory_space<vmem>>) attributes {dimension_semantics = [#tpu.dimension_semantics<parallel>, #tpu.dimension_semantics<parallel>], iteration_bounds = array<i64: 2, 1>, scalar_prefetch = 0 : i64, scratch_operands = 0 : i64, tpu.core_type = #tpu.core_type<tc>, window_params = [{transform_indices = @transform_0, window_bounds = array<i64: 1, 8, 32>}, {transform_indices = @transform_1, window_bounds = array<i64: 1, 8, 32>}, {transform_indices = @transform_2, window_bounds = array<i64: 1, 8, 32>}, {transform_indices = @transform_3, window_bounds = array<i64: 1, 1, 8>}, {transform_indices = @transform_4, window_bounds = array<i64: 1, 8, 32>}]} {
    %c0 = arith.constant 0 : index
    %c0_0 = arith.constant 0 : index
    %c0_1 = arith.constant 0 : index
    %0 = vector.load %arg5[%c0, %c0_0, %c0_1] : memref<1x1x8xf32, #tpu.memory_space<vmem>>, vector<1x1x8xf32>
    %1 = vector.shape_cast %0 : vector<1x1x8xf32> to vector<1x8xf32>
    %c0_2 = arith.constant 0 : index
    %c0_3 = arith.constant 0 : index
    %c0_4 = arith.constant 0 : index
    %2 = vector.load %arg2[%c0_2, %c0_3, %c0_4] : memref<1x8x32xf32, #tpu.memory_space<vmem>>, vector<1x8x32xf32>
    %3 = vector.shape_cast %2 : vector<1x8x32xf32> to vector<8x32xf32>
    %c0_5 = arith.constant 0 : index
    %c0_6 = arith.constant 0 : index
    %c0_7 = arith.constant 0 : index
    %4 = vector.load %arg3[%c0_5, %c0_6, %c0_7] : memref<1x8x32xf32, #tpu.memory_space<vmem>>, vector<1x8x32xf32>
    %5 = vector.shape_cast %4 : vector<1x8x32xf32> to vector<8x32xf32>
    %c0_8 = arith.constant 0 : index
    %c0_9 = arith.constant 0 : index
    %c0_10 = arith.constant 0 : index
    %6 = vector.load %arg4[%c0_8, %c0_9, %c0_10] : memref<1x8x32xf32, #tpu.memory_space<vmem>>, vector<1x8x32xf32>
    %7 = vector.shape_cast %6 : vector<1x8x32xf32> to vector<8x32xf32>
    %8 = vector.extract_strided_slice %3 {offsets = [0, 0], sizes = [8, 8], strides = [1, 1]} : vector<8x32xf32> to vector<8x8xf32>
    %cst = arith.constant 0.353553385 : f32
    %9 = vector.broadcast %cst : f32 to vector<8x8xf32>
    %10 = arith.mulf %8, %9 : vector<8x8xf32>
    %11 = vector.extract_strided_slice %5 {offsets = [0, 0], sizes = [8, 8], strides = [1, 1]} : vector<8x32xf32> to vector<8x8xf32>
    %12 = vector.extract_strided_slice %7 {offsets = [0, 0], sizes = [8, 8], strides = [1, 1]} : vector<8x32xf32> to vector<8x8xf32>
    %cst_11 = arith.constant dense<0.000000e+00> : vector<8x8xf32>
    %13 = tpu.matmul %10, %11, %cst_11 {dimension_numbers = #tpu.dot_dimension_numbers<[1], [1], [0], [0], [0, 0, 1, 0], [], []>} : vector<8x8xf32>, vector<8x8xf32>, vector<8x8xf32> -> vector<8x8xf32>
    %14 = vector.broadcast %1 : vector<1x8xf32> to vector<8x8xf32>
    %15 = arith.addf %13, %14 : vector<8x8xf32>
    %cst_12 = arith.constant dense<0xFF800000> : vector<8xf32>
    %16 = vector.multi_reduction <maximumf>, %15, %cst_12 [1] : vector<8x8xf32> to vector<8xf32>
    %17 = vector.shape_cast %16 : vector<8xf32> to vector<8x1xf32>
    %18 = vector.broadcast %17 : vector<8x1xf32> to vector<8x8xf32>
    %19 = arith.subf %15, %18 : vector<8x8xf32>
    %20 = math.exp %19 : vector<8x8xf32>
    %cst_13 = arith.constant dense<0.000000e+00> : vector<8xf32>
    %21 = vector.multi_reduction <add>, %20, %cst_13 [1] : vector<8x8xf32> to vector<8xf32>
    %22 = vector.shape_cast %21 : vector<8xf32> to vector<8x1xf32>
    %cst_14 = arith.constant dense<0.000000e+00> : vector<8x8xf32>
    %23 = tpu.matmul %20, %12, %cst_14 {dimension_numbers = #tpu.dot_dimension_numbers<[1], [0], [0], [1], [0, 0, 1, 1], [], []>} : vector<8x8xf32>, vector<8x8xf32>, vector<8x8xf32> -> vector<8x8xf32>
    %24 = vector.broadcast %22 : vector<8x1xf32> to vector<8x8xf32>
    %25 = arith.divf %23, %24 : vector<8x8xf32>
    %26 = vector.extract_strided_slice %3 {offsets = [0, 8], sizes = [8, 8], strides = [1, 1]} : vector<8x32xf32> to vector<8x8xf32>
    %cst_15 = arith.constant 0.353553385 : f32
    %27 = vector.broadcast %cst_15 : f32 to vector<8x8xf32>
    %28 = arith.mulf %26, %27 : vector<8x8xf32>
    %29 = vector.extract_strided_slice %5 {offsets = [0, 8], sizes = [8, 8], strides = [1, 1]} : vector<8x32xf32> to vector<8x8xf32>
    %30 = vector.extract_strided_slice %7 {offsets = [0, 8], sizes = [8, 8], strides = [1, 1]} : vector<8x32xf32> to vector<8x8xf32>
    %cst_16 = arith.constant dense<0.000000e+00> : vector<8x8xf32>
    %31 = tpu.matmul %28, %29, %cst_16 {dimension_numbers = #tpu.dot_dimension_numbers<[1], [1], [0], [0], [0, 0, 1, 0], [], []>} : vector<8x8xf32>, vector<8x8xf32>, vector<8x8xf32> -> vector<8x8xf32>
    %32 = vector.broadcast %1 : vector<1x8xf32> to vector<8x8xf32>
    %33 = arith.addf %31, %32 : vector<8x8xf32>
    %cst_17 = arith.constant dense<0xFF800000> : vector<8xf32>
    %34 = vector.multi_reduction <maximumf>, %33, %cst_17 [1] : vector<8x8xf32> to vector<8xf32>
    %35 = vector.shape_cast %34 : vector<8xf32> to vector<8x1xf32>
    %36 = vector.broadcast %35 : vector<8x1xf32> to vector<8x8xf32>
    %37 = arith.subf %33, %36 : vector<8x8xf32>
    %38 = math.exp %37 : vector<8x8xf32>
    %cst_18 = arith.constant dense<0.000000e+00> : vector<8xf32>
    %39 = vector.multi_reduction <add>, %38, %cst_18 [1] : vector<8x8xf32> to vector<8xf32>
    %40 = vector.shape_cast %39 : vector<8xf32> to vector<8x1xf32>
    %cst_19 = arith.constant dense<0.000000e+00> : vector<8x8xf32>
    %41 = tpu.matmul %38, %30, %cst_19 {dimension_numbers = #tpu.dot_dimension_numbers<[1], [0], [0], [1], [0, 0, 1, 1], [], []>} : vector<8x8xf32>, vector<8x8xf32>, vector<8x8xf32> -> vector<8x8xf32>
    %42 = vector.broadcast %40 : vector<8x1xf32> to vector<8x8xf32>
    %43 = arith.divf %41, %42 : vector<8x8xf32>
    %44 = vector.extract_strided_slice %3 {offsets = [0, 16], sizes = [8, 8], strides = [1, 1]} : vector<8x32xf32> to vector<8x8xf32>
    %cst_20 = arith.constant 0.353553385 : f32
    %45 = vector.broadcast %cst_20 : f32 to vector<8x8xf32>
    %46 = arith.mulf %44, %45 : vector<8x8xf32>
    %47 = vector.extract_strided_slice %5 {offsets = [0, 16], sizes = [8, 8], strides = [1, 1]} : vector<8x32xf32> to vector<8x8xf32>
    %48 = vector.extract_strided_slice %7 {offsets = [0, 16], sizes = [8, 8], strides = [1, 1]} : vector<8x32xf32> to vector<8x8xf32>
    %cst_21 = arith.constant dense<0.000000e+00> : vector<8x8xf32>
    %49 = tpu.matmul %46, %47, %cst_21 {dimension_numbers = #tpu.dot_dimension_numbers<[1], [1], [0], [0], [0, 0, 1, 0], [], []>} : vector<8x8xf32>, vector<8x8xf32>, vector<8x8xf32> -> vector<8x8xf32>
    %50 = vector.broadcast %1 : vector<1x8xf32> to vector<8x8xf32>
    %51 = arith.addf %49, %50 : vector<8x8xf32>
    %cst_22 = arith.constant dense<0xFF800000> : vector<8xf32>
    %52 = vector.multi_reduction <maximumf>, %51, %cst_22 [1] : vector<8x8xf32> to vector<8xf32>
    %53 = vector.shape_cast %52 : vector<8xf32> to vector<8x1xf32>
    %54 = vector.broadcast %53 : vector<8x1xf32> to vector<8x8xf32>
    %55 = arith.subf %51, %54 : vector<8x8xf32>
    %56 = math.exp %55 : vector<8x8xf32>
    %cst_23 = arith.constant dense<0.000000e+00> : vector<8xf32>
    %57 = vector.multi_reduction <add>, %56, %cst_23 [1] : vector<8x8xf32> to vector<8xf32>
    %58 = vector.shape_cast %57 : vector<8xf32> to vector<8x1xf32>
    %cst_24 = arith.constant dense<0.000000e+00> : vector<8x8xf32>
    %59 = tpu.matmul %56, %48, %cst_24 {dimension_numbers = #tpu.dot_dimension_numbers<[1], [0], [0], [1], [0, 0, 1, 1], [], []>} : vector<8x8xf32>, vector<8x8xf32>, vector<8x8xf32> -> vector<8x8xf32>
    %60 = vector.broadcast %58 : vector<8x1xf32> to vector<8x8xf32>
    %61 = arith.divf %59, %60 : vector<8x8xf32>
    %62 = vector.extract_strided_slice %3 {offsets = [0, 24], sizes = [8, 8], strides = [1, 1]} : vector<8x32xf32> to vector<8x8xf32>
    %cst_25 = arith.constant 0.353553385 : f32
    %63 = vector.broadcast %cst_25 : f32 to vector<8x8xf32>
    %64 = arith.mulf %62, %63 : vector<8x8xf32>
    %65 = vector.extract_strided_slice %5 {offsets = [0, 24], sizes = [8, 8], strides = [1, 1]} : vector<8x32xf32> to vector<8x8xf32>
    %66 = vector.extract_strided_slice %7 {offsets = [0, 24], sizes = [8, 8], strides = [1, 1]} : vector<8x32xf32> to vector<8x8xf32>
    %cst_26 = arith.constant dense<0.000000e+00> : vector<8x8xf32>
    %67 = tpu.matmul %64, %65, %cst_26 {dimension_numbers = #tpu.dot_dimension_numbers<[1], [1], [0], [0], [0, 0, 1, 0], [], []>} : vector<8x8xf32>, vector<8x8xf32>, vector<8x8xf32> -> vector<8x8xf32>
    %68 = vector.broadcast %1 : vector<1x8xf32> to vector<8x8xf32>
    %69 = arith.addf %67, %68 : vector<8x8xf32>
    %cst_27 = arith.constant dense<0xFF800000> : vector<8xf32>
    %70 = vector.multi_reduction <maximumf>, %69, %cst_27 [1] : vector<8x8xf32> to vector<8xf32>
    %71 = vector.shape_cast %70 : vector<8xf32> to vector<8x1xf32>
    %72 = vector.broadcast %71 : vector<8x1xf32> to vector<8x8xf32>
    %73 = arith.subf %69, %72 : vector<8x8xf32>
    %74 = math.exp %73 : vector<8x8xf32>
    %cst_28 = arith.constant dense<0.000000e+00> : vector<8xf32>
    %75 = vector.multi_reduction <add>, %74, %cst_28 [1] : vector<8x8xf32> to vector<8xf32>
    %76 = vector.shape_cast %75 : vector<8xf32> to vector<8x1xf32>
    %cst_29 = arith.constant dense<0.000000e+00> : vector<8x8xf32>
    %77 = tpu.matmul %74, %66, %cst_29 {dimension_numbers = #tpu.dot_dimension_numbers<[1], [0], [0], [1], [0, 0, 1, 1], [], []>} : vector<8x8xf32>, vector<8x8xf32>, vector<8x8xf32> -> vector<8x8xf32>
    %78 = vector.broadcast %76 : vector<8x1xf32> to vector<8x8xf32>
    %79 = arith.divf %77, %78 : vector<8x8xf32>
    %80 = tpu.concatenate %25, %43, %61, %79 in 1 : vector<8x8xf32>, vector<8x8xf32>, vector<8x8xf32>, vector<8x8xf32> -> vector<8x32xf32>
    %c0_30 = arith.constant 0 : index
    %c0_31 = arith.constant 0 : index
    %c0_32 = arith.constant 0 : index
    %81 = vector.load %arg6[%c0_30, %c0_31, %c0_32] : memref<1x8x32xf32, #tpu.memory_space<vmem>>, vector<1x8x32xf32>
    %82 = vector.shape_cast %81 : vector<1x8x32xf32> to vector<8x32xf32>
    %83 = vector.shape_cast %80 : vector<8x32xf32> to vector<1x8x32xf32>
    tpu.vector_store %arg6[%c0_30, %c0_31, %c0_32], %83 {strides = array<i32>} : memref<1x8x32xf32, #tpu.memory_space<vmem>>, vector<1x8x32xf32>,
    return
  }
  func.func @transform_0(%arg0: i32, %arg1: i32) -> (i32, i32, i32) {
    %c0_i32 = arith.constant 0 : i32
    %c0_i32_0 = arith.constant 0 : i32
    return %arg0, %c0_i32, %arg1 : i32, i32, i32
  }
  func.func @transform_1(%arg0: i32, %arg1: i32) -> (i32, i32, i32) {
    %c0_i32 = arith.constant 0 : i32
    %c0_i32_0 = arith.constant 0 : i32
    return %arg0, %c0_i32, %arg1 : i32, i32, i32
  }
  func.func @transform_2(%arg0: i32, %arg1: i32) -> (i32, i32, i32) {
    %c0_i32 = arith.constant 0 : i32
    %c0_i32_0 = arith.constant 0 : i32
    return %arg0, %c0_i32, %arg1 : i32, i32, i32
  }
  func.func @transform_3(%arg0: i32, %arg1: i32) -> (i32, i32, i32) {
    %c0_i32 = arith.constant 0 : i32
    %c0_i32_0 = arith.constant 0 : i32
    %c0_i32_1 = arith.constant 0 : i32
    return %arg0, %c0_i32, %c0_i32_0 : i32, i32, i32
  }
  func.func @transform_4(%arg0: i32, %arg1: i32) -> (i32, i32, i32) {
    %c0_i32 = arith.constant 0 : i32
    %c0_i32_0 = arith.constant 0 : i32
    return %arg0, %c0_i32, %arg1 : i32, i32, i32
  }
}

module attributes {stable_mosaic.version = 11 : i64} {
  func.func @_dense_residual_ln_kernel(%arg0: i32, %arg1: memref<16x32xf32, #tpu.memory_space<vmem>>, %arg2: memref<16x32xf32, #tpu.memory_space<vmem>>, %arg3: memref<32x32xf32, #tpu.memory_space<vmem>>, %arg4: memref<1x32xf32, #tpu.memory_space<vmem>>, %arg5: memref<1x32xf32, #tpu.memory_space<vmem>>, %arg6: memref<1x32xf32, #tpu.memory_space<vmem>>, %arg7: memref<16x32xf32, #tpu.memory_space<vmem>>) attributes {dimension_semantics = [#tpu.dimension_semantics<parallel>], iteration_bounds = array<i64: 1>, scalar_prefetch = 0 : i64, scratch_operands = 0 : i64, tpu.core_type = #tpu.core_type<tc>, window_params = [{transform_indices = @transform_0, window_bounds = array<i64: 16, 32>}, {transform_indices = @transform_1, window_bounds = array<i64: 16, 32>}, {pipeline_mode = #tpu.pipeline_mode<synchronous>, transform_indices = @transform_2, window_bounds = array<i64: 32, 32>}, {pipeline_mode = #tpu.pipeline_mode<synchronous>, transform_indices = @transform_3, window_bounds = array<i64: 1, 32>}, {pipeline_mode = #tpu.pipeline_mode<synchronous>, transform_indices = @transform_4, window_bounds = array<i64: 1, 32>}, {pipeline_mode = #tpu.pipeline_mode<synchronous>, transform_indices = @transform_5, window_bounds = array<i64: 1, 32>}, {transform_indices = @transform_6, window_bounds = array<i64: 16, 32>}]} {
    %c0 = arith.constant 0 : index
    %c0_0 = arith.constant 0 : index
    %0 = vector.load %arg1[%c0, %c0_0] : memref<16x32xf32, #tpu.memory_space<vmem>>, vector<16x32xf32>
    %c0_1 = arith.constant 0 : index
    %c0_2 = arith.constant 0 : index
    %1 = vector.load %arg3[%c0_1, %c0_2] : memref<32x32xf32, #tpu.memory_space<vmem>>, vector<32x32xf32>
    %cst = arith.constant dense<0.000000e+00> : vector<16x32xf32>
    %2 = tpu.matmul %0, %1, %cst {dimension_numbers = #tpu.dot_dimension_numbers<[1], [0], [0], [1], [0, 0, 1, 1], [], []>} : vector<16x32xf32>, vector<32x32xf32>, vector<16x32xf32> -> vector<16x32xf32>
    %c0_3 = arith.constant 0 : index
    %c0_4 = arith.constant 0 : index
    %3 = vector.load %arg4[%c0_3, %c0_4] : memref<1x32xf32, #tpu.memory_space<vmem>>, vector<1x32xf32>
    %4 = vector.broadcast %3 : vector<1x32xf32> to vector<16x32xf32>
    %5 = arith.addf %2, %4 : vector<16x32xf32>
    %c0_5 = arith.constant 0 : index
    %c0_6 = arith.constant 0 : index
    %6 = vector.load %arg2[%c0_5, %c0_6] : memref<16x32xf32, #tpu.memory_space<vmem>>, vector<16x32xf32>
    %7 = arith.addf %5, %6 : vector<16x32xf32>
    %cst_7 = arith.constant dense<0.000000e+00> : vector<16xf32>
    %8 = vector.multi_reduction <add>, %7, %cst_7 [1] : vector<16x32xf32> to vector<16xf32>
    %9 = vector.shape_cast %8 : vector<16xf32> to vector<16x1xf32>
    %cst_8 = arith.constant 3.200000e+01 : f32
    %10 = vector.broadcast %cst_8 : f32 to vector<16x1xf32>
    %11 = arith.divf %9, %10 : vector<16x1xf32>
    %12 = vector.broadcast %11 : vector<16x1xf32> to vector<16x32xf32>
    %13 = arith.subf %7, %12 : vector<16x32xf32>
    %14 = arith.mulf %13, %13 : vector<16x32xf32>
    %cst_9 = arith.constant dense<0.000000e+00> : vector<16xf32>
    %15 = vector.multi_reduction <add>, %14, %cst_9 [1] : vector<16x32xf32> to vector<16xf32>
    %16 = vector.shape_cast %15 : vector<16xf32> to vector<16x1xf32>
    %cst_10 = arith.constant 3.200000e+01 : f32
    %17 = vector.broadcast %cst_10 : f32 to vector<16x1xf32>
    %18 = arith.divf %16, %17 : vector<16x1xf32>
    %19 = vector.broadcast %11 : vector<16x1xf32> to vector<16x32xf32>
    %20 = arith.subf %7, %19 : vector<16x32xf32>
    %cst_11 = arith.constant 9.99999996E-13 : f32
    %21 = vector.broadcast %cst_11 : f32 to vector<16x1xf32>
    %22 = arith.addf %18, %21 : vector<16x1xf32>
    %23 = math.rsqrt %22 : vector<16x1xf32>
    %24 = vector.broadcast %23 : vector<16x1xf32> to vector<16x32xf32>
    %25 = arith.mulf %20, %24 : vector<16x32xf32>
    %c0_12 = arith.constant 0 : index
    %c0_13 = arith.constant 0 : index
    %26 = vector.load %arg5[%c0_12, %c0_13] : memref<1x32xf32, #tpu.memory_space<vmem>>, vector<1x32xf32>
    %27 = vector.broadcast %26 : vector<1x32xf32> to vector<16x32xf32>
    %28 = arith.mulf %25, %27 : vector<16x32xf32>
    %c0_14 = arith.constant 0 : index
    %c0_15 = arith.constant 0 : index
    %29 = vector.load %arg6[%c0_14, %c0_15] : memref<1x32xf32, #tpu.memory_space<vmem>>, vector<1x32xf32>
    %30 = vector.broadcast %29 : vector<1x32xf32> to vector<16x32xf32>
    %31 = arith.addf %28, %30 : vector<16x32xf32>
    %c0_16 = arith.constant 0 : index
    %c0_17 = arith.constant 0 : index
    %32 = vector.load %arg7[%c0_16, %c0_17] : memref<16x32xf32, #tpu.memory_space<vmem>>, vector<16x32xf32>
    tpu.vector_store %arg7[%c0_16, %c0_17], %31 {strides = array<i32>} : memref<16x32xf32, #tpu.memory_space<vmem>>, vector<16x32xf32>,
    return
  }
  func.func @transform_0(%arg0: i32) -> (i32, i32) {
    %c0_i32 = arith.constant 0 : i32
    %c0_i32_0 = arith.constant 0 : i32
    return %arg0, %c0_i32 : i32, i32
  }
  func.func @transform_1(%arg0: i32) -> (i32, i32) {
    %c0_i32 = arith.constant 0 : i32
    %c0_i32_0 = arith.constant 0 : i32
    return %arg0, %c0_i32 : i32, i32
  }
  func.func @transform_2(%arg0: i32) -> (i32, i32) {
    %c0_i32 = arith.constant 0 : i32
    %c0_i32_0 = arith.constant 0 : i32
    %c0_i32_1 = arith.constant 0 : i32
    return %c0_i32, %c0_i32_0 : i32, i32
  }
  func.func @transform_3(%arg0: i32) -> (i32, i32) {
    %c0_i32 = arith.constant 0 : i32
    %c0_i32_0 = arith.constant 0 : i32
    %c0_i32_1 = arith.constant 0 : i32
    return %c0_i32, %c0_i32_0 : i32, i32
  }
  func.func @transform_4(%arg0: i32) -> (i32, i32) {
    %c0_i32 = arith.constant 0 : i32
    %c0_i32_0 = arith.constant 0 : i32
    %c0_i32_1 = arith.constant 0 : i32
    return %c0_i32, %c0_i32_0 : i32, i32
  }
  func.func @transform_5(%arg0: i32) -> (i32, i32) {
    %c0_i32 = arith.constant 0 : i32
    %c0_i32_0 = arith.constant 0 : i32
    %c0_i32_1 = arith.constant 0 : i32
    return %c0_i32, %c0_i32_0 : i32, i32
  }
  func.func @transform_6(%arg0: i32) -> (i32, i32) {
    %c0_i32 = arith.constant 0 : i32
    %c0_i32_0 = arith.constant 0 : i32
    return %arg0, %c0_i32 : i32, i32
  }
}

module attributes {stable_mosaic.version = 11 : i64} {
  func.func @_dense_qkv_kernel(%arg0: i32, %arg1: memref<16x32xf32, #tpu.memory_space<vmem>>, %arg2: memref<32x96xf32, #tpu.memory_space<vmem>>, %arg3: memref<1x96xf32, #tpu.memory_space<vmem>>, %arg4: memref<16x32xf32, #tpu.memory_space<vmem>>, %arg5: memref<16x32xf32, #tpu.memory_space<vmem>>, %arg6: memref<16x32xf32, #tpu.memory_space<vmem>>) attributes {dimension_semantics = [#tpu.dimension_semantics<parallel>], iteration_bounds = array<i64: 1>, scalar_prefetch = 0 : i64, scratch_operands = 0 : i64, tpu.core_type = #tpu.core_type<tc>, window_params = [{transform_indices = @transform_0, window_bounds = array<i64: 16, 32>}, {pipeline_mode = #tpu.pipeline_mode<synchronous>, transform_indices = @transform_1, window_bounds = array<i64: 32, 96>}, {pipeline_mode = #tpu.pipeline_mode<synchronous>, transform_indices = @transform_2, window_bounds = array<i64: 1, 96>}, {transform_indices = @transform_3, window_bounds = array<i64: 16, 32>}, {transform_indices = @transform_4, window_bounds = array<i64: 16, 32>}, {transform_indices = @transform_5, window_bounds = array<i64: 16, 32>}]} {
    %c0 = arith.constant 0 : index
    %c0_0 = arith.constant 0 : index
    %0 = vector.load %arg1[%c0, %c0_0] : memref<16x32xf32, #tpu.memory_space<vmem>>, vector<16x32xf32>
    %c0_1 = arith.constant 0 : index
    %c0_2 = arith.constant 0 : index
    %1 = vector.load %arg2[%c0_1, %c0_2] : memref<32x96xf32, #tpu.memory_space<vmem>>, vector<32x96xf32>
    %cst = arith.constant dense<0.000000e+00> : vector<16x96xf32>
    %2 = tpu.matmul %0, %1, %cst {dimension_numbers = #tpu.dot_dimension_numbers<[1], [0], [0], [1], [0, 0, 1, 1], [], []>} : vector<16x32xf32>, vector<32x96xf32>, vector<16x96xf32> -> vector<16x96xf32>
    %c0_3 = arith.constant 0 : index
    %c0_4 = arith.constant 0 : index
    %3 = vector.load %arg3[%c0_3, %c0_4] : memref<1x96xf32, #tpu.memory_space<vmem>>, vector<1x96xf32>
    %4 = vector.broadcast %3 : vector<1x96xf32> to vector<16x96xf32>
    %5 = arith.addf %2, %4 : vector<16x96xf32>
    %6 = vector.extract_strided_slice %5 {offsets = [0, 0], sizes = [16, 32], strides = [1, 1]} : vector<16x96xf32> to vector<16x32xf32>
    %c0_5 = arith.constant 0 : index
    %c0_6 = arith.constant 0 : index
    %7 = vector.load %arg4[%c0_5, %c0_6] : memref<16x32xf32, #tpu.memory_space<vmem>>, vector<16x32xf32>
    tpu.vector_store %arg4[%c0_5, %c0_6], %6 {strides = array<i32>} : memref<16x32xf32, #tpu.memory_space<vmem>>, vector<16x32xf32>,
    %8 = vector.extract_strided_slice %5 {offsets = [0, 32], sizes = [16, 32], strides = [1, 1]} : vector<16x96xf32> to vector<16x32xf32>
    %c0_7 = arith.constant 0 : index
    %c0_8 = arith.constant 0 : index
    %9 = vector.load %arg5[%c0_7, %c0_8] : memref<16x32xf32, #tpu.memory_space<vmem>>, vector<16x32xf32>
    tpu.vector_store %arg5[%c0_7, %c0_8], %8 {strides = array<i32>} : memref<16x32xf32, #tpu.memory_space<vmem>>, vector<16x32xf32>,
    %10 = vector.extract_strided_slice %5 {offsets = [0, 64], sizes = [16, 32], strides = [1, 1]} : vector<16x96xf32> to vector<16x32xf32>
    %c0_9 = arith.constant 0 : index
    %c0_10 = arith.constant 0 : index
    %11 = vector.load %arg6[%c0_9, %c0_10] : memref<16x32xf32, #tpu.memory_space<vmem>>, vector<16x32xf32>
    tpu.vector_store %arg6[%c0_9, %c0_10], %10 {strides = array<i32>} : memref<16x32xf32, #tpu.memory_space<vmem>>, vector<16x32xf32>,
    return
  }
  func.func @transform_0(%arg0: i32) -> (i32, i32) {
    %c0_i32 = arith.constant 0 : i32
    %c0_i32_0 = arith.constant 0 : i32
    return %arg0, %c0_i32 : i32, i32
  }
  func.func @transform_1(%arg0: i32) -> (i32, i32) {
    %c0_i32 = arith.constant 0 : i32
    %c0_i32_0 = arith.constant 0 : i32
    %c0_i32_1 = arith.constant 0 : i32
    return %c0_i32, %c0_i32_0 : i32, i32
  }
  func.func @transform_2(%arg0: i32) -> (i32, i32) {
    %c0_i32 = arith.constant 0 : i32
    %c0_i32_0 = arith.constant 0 : i32
    %c0_i32_1 = arith.constant 0 : i32
    return %c0_i32, %c0_i32_0 : i32, i32
  }
  func.func @transform_3(%arg0: i32) -> (i32, i32) {
    %c0_i32 = arith.constant 0 : i32
    %c0_i32_0 = arith.constant 0 : i32
    return %arg0, %c0_i32 : i32, i32
  }
  func.func @transform_4(%arg0: i32) -> (i32, i32) {
    %c0_i32 = arith.constant 0 : i32
    %c0_i32_0 = arith.constant 0 : i32
    return %arg0, %c0_i32 : i32, i32
  }
  func.func @transform_5(%arg0: i32) -> (i32, i32) {
    %c0_i32 = arith.constant 0 : i32
    %c0_i32_0 = arith.constant 0 : i32
    return %arg0, %c0_i32 : i32, i32
  }
}

module attributes {stable_mosaic.version = 11 : i64} {
  func.func @_mlp_residual_ln_kernel(%arg0: i32, %arg1: memref<16x32xf32, #tpu.memory_space<vmem>>, %arg2: memref<32x128xf32, #tpu.memory_space<vmem>>, %arg3: memref<1x128xf32, #tpu.memory_space<vmem>>, %arg4: memref<128x32xf32, #tpu.memory_space<vmem>>, %arg5: memref<1x32xf32, #tpu.memory_space<vmem>>, %arg6: memref<1x32xf32, #tpu.memory_space<vmem>>, %arg7: memref<1x32xf32, #tpu.memory_space<vmem>>, %arg8: memref<16x32xf32, #tpu.memory_space<vmem>>) attributes {dimension_semantics = [#tpu.dimension_semantics<parallel>], iteration_bounds = array<i64: 1>, scalar_prefetch = 0 : i64, scratch_operands = 0 : i64, tpu.core_type = #tpu.core_type<tc>, window_params = [{transform_indices = @transform_0, window_bounds = array<i64: 16, 32>}, {pipeline_mode = #tpu.pipeline_mode<synchronous>, transform_indices = @transform_1, window_bounds = array<i64: 32, 128>}, {pipeline_mode = #tpu.pipeline_mode<synchronous>, transform_indices = @transform_2, window_bounds = array<i64: 1, 128>}, {pipeline_mode = #tpu.pipeline_mode<synchronous>, transform_indices = @transform_3, window_bounds = array<i64: 128, 32>}, {pipeline_mode = #tpu.pipeline_mode<synchronous>, transform_indices = @transform_4, window_bounds = array<i64: 1, 32>}, {pipeline_mode = #tpu.pipeline_mode<synchronous>, transform_indices = @transform_5, window_bounds = array<i64: 1, 32>}, {pipeline_mode = #tpu.pipeline_mode<synchronous>, transform_indices = @transform_6, window_bounds = array<i64: 1, 32>}, {transform_indices = @transform_7, window_bounds = array<i64: 16, 32>}]} {
    %c0 = arith.constant 0 : index
    %c0_0 = arith.constant 0 : index
    %0 = vector.load %arg1[%c0, %c0_0] : memref<16x32xf32, #tpu.memory_space<vmem>>, vector<16x32xf32>
    %c0_1 = arith.constant 0 : index
    %c0_2 = arith.constant 0 : index
    %1 = vector.load %arg2[%c0_1, %c0_2] : memref<32x128xf32, #tpu.memory_space<vmem>>, vector<32x128xf32>
    %cst = arith.constant dense<0.000000e+00> : vector<16x128xf32>
    %2 = tpu.matmul %0, %1, %cst {dimension_numbers = #tpu.dot_dimension_numbers<[1], [0], [0], [1], [0, 0, 1, 1], [], []>} : vector<16x32xf32>, vector<32x128xf32>, vector<16x128xf32> -> vector<16x128xf32>
    %c0_3 = arith.constant 0 : index
    %c0_4 = arith.constant 0 : index
    %3 = vector.load %arg3[%c0_3, %c0_4] : memref<1x128xf32, #tpu.memory_space<vmem>>, vector<1x128xf32>
    %4 = vector.broadcast %3 : vector<1x128xf32> to vector<16x128xf32>
    %5 = arith.addf %2, %4 : vector<16x128xf32>
    %cst_5 = arith.constant 5.000000e-01 : f32
    %6 = vector.broadcast %cst_5 : f32 to vector<16x128xf32>
    %7 = arith.mulf %5, %6 : vector<16x128xf32>
    %cst_6 = arith.constant 0.707106769 : f32
    %8 = vector.broadcast %cst_6 : f32 to vector<16x128xf32>
    %9 = arith.mulf %5, %8 : vector<16x128xf32>
    %10 = math.erf %9 : vector<16x128xf32>
    %cst_7 = arith.constant 1.000000e+00 : f32
    %11 = vector.broadcast %cst_7 : f32 to vector<16x128xf32>
    %12 = arith.addf %11, %10 : vector<16x128xf32>
    %13 = arith.mulf %7, %12 : vector<16x128xf32>
    %c0_8 = arith.constant 0 : index
    %c0_9 = arith.constant 0 : index
    %14 = vector.load %arg4[%c0_8, %c0_9] : memref<128x32xf32, #tpu.memory_space<vmem>>, vector<128x32xf32>
    %cst_10 = arith.constant dense<0.000000e+00> : vector<16x32xf32>
    %15 = tpu.matmul %13, %14, %cst_10 {dimension_numbers = #tpu.dot_dimension_numbers<[1], [0], [0], [1], [0, 0, 1, 1], [], []>} : vector<16x128xf32>, vector<128x32xf32>, vector<16x32xf32> -> vector<16x32xf32>
    %c0_11 = arith.constant 0 : index
    %c0_12 = arith.constant 0 : index
    %16 = vector.load %arg5[%c0_11, %c0_12] : memref<1x32xf32, #tpu.memory_space<vmem>>, vector<1x32xf32>
    %17 = vector.broadcast %16 : vector<1x32xf32> to vector<16x32xf32>
    %18 = arith.addf %15, %17 : vector<16x32xf32>
    %19 = arith.addf %18, %0 : vector<16x32xf32>
    %cst_13 = arith.constant dense<0.000000e+00> : vector<16xf32>
    %20 = vector.multi_reduction <add>, %19, %cst_13 [1] : vector<16x32xf32> to vector<16xf32>
    %21 = vector.shape_cast %20 : vector<16xf32> to vector<16x1xf32>
    %cst_14 = arith.constant 3.200000e+01 : f32
    %22 = vector.broadcast %cst_14 : f32 to vector<16x1xf32>
    %23 = arith.divf %21, %22 : vector<16x1xf32>
    %24 = vector.broadcast %23 : vector<16x1xf32> to vector<16x32xf32>
    %25 = arith.subf %19, %24 : vector<16x32xf32>
    %26 = arith.mulf %25, %25 : vector<16x32xf32>
    %cst_15 = arith.constant dense<0.000000e+00> : vector<16xf32>
    %27 = vector.multi_reduction <add>, %26, %cst_15 [1] : vector<16x32xf32> to vector<16xf32>
    %28 = vector.shape_cast %27 : vector<16xf32> to vector<16x1xf32>
    %cst_16 = arith.constant 3.200000e+01 : f32
    %29 = vector.broadcast %cst_16 : f32 to vector<16x1xf32>
    %30 = arith.divf %28, %29 : vector<16x1xf32>
    %31 = vector.broadcast %23 : vector<16x1xf32> to vector<16x32xf32>
    %32 = arith.subf %19, %31 : vector<16x32xf32>
    %cst_17 = arith.constant 9.99999996E-13 : f32
    %33 = vector.broadcast %cst_17 : f32 to vector<16x1xf32>
    %34 = arith.addf %30, %33 : vector<16x1xf32>
    %35 = math.rsqrt %34 : vector<16x1xf32>
    %36 = vector.broadcast %35 : vector<16x1xf32> to vector<16x32xf32>
    %37 = arith.mulf %32, %36 : vector<16x32xf32>
    %c0_18 = arith.constant 0 : index
    %c0_19 = arith.constant 0 : index
    %38 = vector.load %arg6[%c0_18, %c0_19] : memref<1x32xf32, #tpu.memory_space<vmem>>, vector<1x32xf32>
    %39 = vector.broadcast %38 : vector<1x32xf32> to vector<16x32xf32>
    %40 = arith.mulf %37, %39 : vector<16x32xf32>
    %c0_20 = arith.constant 0 : index
    %c0_21 = arith.constant 0 : index
    %41 = vector.load %arg7[%c0_20, %c0_21] : memref<1x32xf32, #tpu.memory_space<vmem>>, vector<1x32xf32>
    %42 = vector.broadcast %41 : vector<1x32xf32> to vector<16x32xf32>
    %43 = arith.addf %40, %42 : vector<16x32xf32>
    %c0_22 = arith.constant 0 : index
    %c0_23 = arith.constant 0 : index
    %44 = vector.load %arg8[%c0_22, %c0_23] : memref<16x32xf32, #tpu.memory_space<vmem>>, vector<16x32xf32>
    tpu.vector_store %arg8[%c0_22, %c0_23], %43 {strides = array<i32>} : memref<16x32xf32, #tpu.memory_space<vmem>>, vector<16x32xf32>,
    return
  }
  func.func @transform_0(%arg0: i32) -> (i32, i32) {
    %c0_i32 = arith.constant 0 : i32
    %c0_i32_0 = arith.constant 0 : i32
    return %arg0, %c0_i32 : i32, i32
  }
  func.func @transform_1(%arg0: i32) -> (i32, i32) {
    %c0_i32 = arith.constant 0 : i32
    %c0_i32_0 = arith.constant 0 : i32
    %c0_i32_1 = arith.constant 0 : i32
    return %c0_i32, %c0_i32_0 : i32, i32
  }
  func.func @transform_2(%arg0: i32) -> (i32, i32) {
    %c0_i32 = arith.constant 0 : i32
    %c0_i32_0 = arith.constant 0 : i32
    %c0_i32_1 = arith.constant 0 : i32
    return %c0_i32, %c0_i32_0 : i32, i32
  }
  func.func @transform_3(%arg0: i32) -> (i32, i32) {
    %c0_i32 = arith.constant 0 : i32
    %c0_i32_0 = arith.constant 0 : i32
    %c0_i32_1 = arith.constant 0 : i32
    return %c0_i32, %c0_i32_0 : i32, i32
  }
  func.func @transform_4(%arg0: i32) -> (i32, i32) {
    %c0_i32 = arith.constant 0 : i32
    %c0_i32_0 = arith.constant 0 : i32
    %c0_i32_1 = arith.constant 0 : i32
    return %c0_i32, %c0_i32_0 : i32, i32
  }
  func.func @transform_5(%arg0: i32) -> (i32, i32) {
    %c0_i32 = arith.constant 0 : i32
    %c0_i32_0 = arith.constant 0 : i32
    %c0_i32_1 = arith.constant 0 : i32
    return %c0_i32, %c0_i32_0 : i32, i32
  }
  func.func @transform_6(%arg0: i32) -> (i32, i32) {
    %c0_i32 = arith.constant 0 : i32
    %c0_i32_0 = arith.constant 0 : i32
    %c0_i32_1 = arith.constant 0 : i32
    return %c0_i32, %c0_i32_0 : i32, i32
  }
  func.func @transform_7(%arg0: i32) -> (i32, i32) {
    %c0_i32 = arith.constant 0 : i32
    %c0_i32_0 = arith.constant 0 : i32
    return %arg0, %c0_i32 : i32, i32
  }
}

</mosaic_0001>

<llo_original>
// kernel: bert_layer.4
$region0: #{bert_layer.4}
  #allocation0 [shape = 'u32[]', space=smem, size = 0x4, offset = 0x4, fixed_abs, tag = 'smem constant byte address 0x4 - core index']
  #allocation1 [shape = 'u32[144,128]{1,0:T(1,128)}', space=vmem, size = 0x12000, scoped, tag = 'internal scratch']
  %s0 = inlined_call_operand.vmem [shape: f32[16,32], index: 0, kind: input, shape index: {}]
  %s1 = inlined_call_operand.hbm [shape: f32[32,96], index: 1, kind: input, shape index: {}]
  %s2 = inlined_call_operand.vmem [shape: f32[1,96], index: 2, kind: input, shape index: {}]
  %s3 = inlined_call_operand.vmem [shape: f32[16,32], index: 3, kind: output, shape index: {0}]
  %s4 = inlined_call_operand.vmem [shape: f32[16,32], index: 4, kind: output, shape index: {1}]
  %s5 = inlined_call_operand.vmem [shape: f32[16,32], index: 5, kind: output, shape index: {2}]
  %6 = xla_tuple %s3, %s4, %s5
  %s7 = sld [smem:[#allocation0]]
  $region42: #{bert_layer.4} parent=0
    _
  %s9 = ssub.s32 1, %s7
  %s10 = scalar_select 0, %s9, %s7
  $region1: #{bert_layer.4} parent=0
    #allocation2 [shape = 'u8[16384]{0}', space=vmem, size = 0x4000, scoped, tag = 'input window, operand 1, single buffered']
    #allocation3 [shape = 's32[1]{0}', space=sflag, size = 0x4, scoped, tag = 'scoped memory for bert_layer.4']
    %11 = vsyncpa [#allocation3], 0
    // Predicated region
    $region2: #{bert_layer.4} parent=1 // pred_check
      _
    $region3: #{bert_layer.4} parent=1 // pred_check_branch
      %13 = sbr.rel (0) target = $region5
    $region4: #{bert_layer.4} parent=1 // pred_region
      _
    $region5: #{bert_layer.4} parent=1 // pred_fallthru
      _
    // Predicated region
    $region6: #{bert_layer.4} parent=1 // pred_check
      _
    $region7: #{bert_layer.4} parent=1 // pred_check_branch
      %15 = sbr.rel (0) target = $region9
    $region8: #{bert_layer.4} parent=1 // pred_region
      %s17 = ssub.s32 512, 512
      %18 = vsyncadd [#allocation3], %s17
      %s19 = sshll.u32 [#allocation2], 4
      %s20 = int_to_ptr.vmem [resolvable:$true] %s19
      %25 = dma.hbm_to_vmem [thread:$0]  %s1, 512, %s20, [#allocation3], 128, 128, 8
    $region9: #{bert_layer.4} parent=1 // pred_fallthru
      _
    // Predicated region
    $region10: #{bert_layer.4} parent=1 // pred_check
      _
    $region11: #{bert_layer.4} parent=1 // pred_check_branch
      %27 = sbr.rel (0) target = $region13
    $region12: #{bert_layer.4} parent=1 // pred_region
      _
    $region13: #{bert_layer.4} parent=1 // pred_fallthru
      _
    // Predicated region
    $region14: #{bert_layer.4} parent=1 // pred_check
      _
    $region15: #{bert_layer.4} parent=1 // pred_check_branch
      %29 = sbr.rel (0) target = $region17
    $region16: #{bert_layer.4} parent=1 // pred_region
      %30 = dma.done [#allocation3], 512
    $region17: #{bert_layer.4} parent=1 // pred_fallthru
      _
    %v31 = vld [vmem:[%s0] sm:$0xff]
    %v32 = vld [vmem:[%s0 + $0x8] sm:$0xff]
    %v33 = vld [vmem:[#allocation2] sm:$0xff]
    %v34 = vld [vmem:[#allocation2 + $0x8] sm:$0xff]
    %v35 = vld [vmem:[#allocation2 + $0x10] sm:$0xff]
    %v36 = vld [vmem:[#allocation2 + $0x18] sm:$0xff]
    %v37 = vld [vmem:[%s2] sm:$0x1]
    %v39 = vlaneseq
    %v40 = vshrl.u32 %v39, 7
    %v41 = vsub.s32 0, %v40
    %v42 = vrot.slane %v37, %v41
    %vm44 = vcmask 261120
    %v46 = vsel %vm44, %v31, 0
    %v49 = vsel %vm44, %v32, 0
    %51 = vmatprep.subr.mxu0 0.0
    %52 = vmatpush1.msra.mxu0 0.0
    %53 = vmatprep.subr.mxu0 0.0
    %54 = vmatpush1.msra.mxu0 0.0
    %55 = vmatprep.subr.mxu0 0.0
    %56 = vmatpush1.msra.mxu0 0.0
    %57 = vmatprep.subr.mxu0 0.0
    %58 = vmatpush1.msra.mxu0 0.0
    %59 = vmatprep.subr.mxu0 0.0
    %60 = vmatpush1.msra.mxu0 0.0
    %61 = vmatprep.subr.mxu0 0.0
    %62 = vmatpush1.msra.mxu0 0.0
    %63 = vmatprep.subr.mxu0 0.0
    %64 = vmatpush1.msra.mxu0 0.0
    %65 = vmatprep.subr.mxu0 0.0
    %66 = vmatpush1.msra.mxu0 0.0
    %67 = vmatprep.subr.mxu0 0.0
    %68 = vmatpush1.msra.mxu0 0.0
    %69 = vmatprep.subr.mxu0 0.0
    %70 = vmatpush1.msra.mxu0 0.0
    %71 = vmatprep.subr.mxu0 0.0
    %72 = vmatpush1.msra.mxu0 0.0
    %73 = vmatprep.subr.mxu0 0.0
    %74 = vmatpush1.msra.mxu0 0.0
    %75 = vmatprep.subr.mxu0 0.0
    %76 = vmatpush1.msra.mxu0 %v36
    %77 = vmatprep.subr.mxu0 0.0
    %78 = vmatpush1.msra.mxu0 %v35
    %79 = vmatprep.subr.mxu0 0.0
    %80 = vmatpush1.msra.mxu0 %v34
    %81 = vmatprep.subr.mxu0 0.0
    %82 = vmatpush1.msra.mxu0 %v33
    %83 = vmatprep.subr.mxu0 0.0
    %84 = vmatpush2.msra.mxu0 0.0
    %85 = vmatprep.subr.mxu0 0.0
    %86 = vmatpush2.msra.mxu0 0.0
    %87 = vmatprep.subr.mxu0 0.0
    %88 = vmatpush2.msra.mxu0 0.0
    %89 = vmatprep.subr.mxu0 0.0
    %90 = vmatpush2.msra.mxu0 0.0
    %91 = vmatprep.subr.mxu0 0.0
    %92 = vmatpush2.msra.mxu0 0.0
    %93 = vmatprep.subr.mxu0 0.0
    %94 = vmatpush2.msra.mxu0 0.0
    %95 = vmatprep.subr.mxu0 0.0
    %96 = vmatpush2.msra.mxu0 0.0
    %97 = vmatprep.subr.mxu0 0.0
    %98 = vmatpush2.msra.mxu0 0.0
    %99 = vmatprep.subr.mxu0 0.0
    %100 = vmatpush2.msra.mxu0 0.0
    %101 = vmatprep.subr.mxu0 0.0
    %102 = vmatpush2.msra.mxu0 0.0
    %103 = vmatprep.subr.mxu0 0.0
    %104 = vmatpush2.msra.mxu0 0.0
    %105 = vmatprep.subr.mxu0 0.0
    %106 = vmatpush2.msra.mxu0 0.0
    %107 = vmatprep.subr.mxu0 0.0
    %108 = vmatpush2.msra.mxu0 0.0
    %109 = vmatprep.subr.mxu0 0.0
    %110 = vmatpush2.msra.mxu0 0.0
    %111 = vmatprep.subr.mxu0 0.0
    %112 = vmatpush2.msra.mxu0 0.0
    %113 = vmatprep.subr.mxu0 0.0
    %114 = vmatpush2.msra.mxu0 0.0
    %115 = vmatprep.mubr.f32.mxu0 0.0
    %116 = vmatmul.mubr.f32.gmra.mxu0 %v46
    %v117 = vpop.f32.mrf.mxu0
    %v118 = vadd.f32 %v42, %v117
    %v119 = vpop.f32.mrf.mxu0
    %120 = vmatprep.mubr.f32.mxu0 0.0
    %121 = vmatmul.mubr.f32.gmra.mxu0 %v49
    %v122 = vpop.f32.mrf.mxu0
    %v123 = vadd.f32 %v42, %v122
    %v124 = vpop.f32.mrf.mxu0
    %125 = vdwg.mxu0
    %126 = vst.msk [vmem:[%s3] sm:$0xff] %vm44, %v118
    %127 = vst.msk [vmem:[%s3 + $0x8] sm:$0xff] %vm44, %v123
    %130 = vrot.lane.b32.xlu0 %v118, 96
    %v131 = vpop.permute.xlu0 %130
    %132 = vrot.lane.b32.xlu0 %v123, 96
    %v133 = vpop.permute.xlu0 %132
    %136 = vst.msk [vmem:[%s4] sm:$0xff] %vm44, %v131
    %137 = vst.msk [vmem:[%s4 + $0x8] sm:$0xff] %vm44, %v133
    %138 = vrot.lane.b32.xlu0 %v118, 64
    %v139 = vpop.permute.xlu0 %138
    %140 = vrot.lane.b32.xlu0 %v123, 64
    %v141 = vpop.permute.xlu0 %140
    %144 = vst.msk [vmem:[%s5] sm:$0xff] %vm44, %v139
    %145 = vst.msk [vmem:[%s5 + $0x8] sm:$0xff] %vm44, %v141
    // Predicated region
    $region18: #{bert_layer.4} parent=1 // pred_check
      _
    $region19: #{bert_layer.4} parent=1 // pred_check_branch
      %147 = sbr.rel (0) target = $region21
    $region20: #{bert_layer.4} parent=1 // pred_region
      _
    $region21: #{bert_layer.4} parent=1 // pred_fallthru
      _
    // Predicated region
    $region22: #{bert_layer.4} parent=1 // pred_check
      _
    $region23: #{bert_layer.4} parent=1 // pred_check_branch
      %149 = sbr.rel (0) target = $region25
    $region24: #{bert_layer.4} parent=1 // pred_region
      _
    $region25: #{bert_layer.4} parent=1 // pred_fallthru
      _
    // Predicated region
    $region26: #{bert_layer.4} parent=1 // pred_check
      _
    $region27: #{bert_layer.4} parent=1 // pred_check_branch
      %151 = sbr.rel (0) target = $region29
    $region28: #{bert_layer.4} parent=1 // pred_region
      _
    $region29: #{bert_layer.4} parent=1 // pred_fallthru
      _
    // Predicated region
    $region30: #{bert_layer.4} parent=1 // pred_check
      _
    $region31: #{bert_layer.4} parent=1 // pred_check_branch
      %153 = sbr.rel (0) target = $region33
    $region32: #{bert_layer.4} parent=1 // pred_region
      _
    $region33: #{bert_layer.4} parent=1 // pred_fallthru
      _
    // Predicated region
    $region34: #{bert_layer.4} parent=1 // pred_check
      _
    $region35: #{bert_layer.4} parent=1 // pred_check_branch
      %155 = sbr.rel (0) target = $region37
    $region36: #{bert_layer.4} parent=1 // pred_region
      _
    $region37: #{bert_layer.4} parent=1 // pred_fallthru
      _
    // Predicated region
    $region38: #{bert_layer.4} parent=1 // pred_check
      _
    $region39: #{bert_layer.4} parent=1 // pred_check_branch
      %157 = sbr.rel (0) target = $region41
    $region40: #{bert_layer.4} parent=1 // pred_region
      _
    $region41: #{bert_layer.4} parent=1 // pred_fallthru
      _
    %158 = vsyncpa [#allocation3], 1

// kernel: bert_layer.6
$region0: #{bert_layer.6}
  #allocation0 [shape = 'u32[]', space=smem, size = 0x4, offset = 0x4, fixed_abs, tag = 'smem constant byte address 0x4 - core index']
  #allocation1 [shape = 'u32[144,128]{1,0:T(1,128)}', space=vmem, size = 0x12000, scoped, tag = 'internal scratch']
  %s0 = inlined_call_operand.vmem [shape: f32[16,32], index: 0, kind: input, shape index: {}]
  %s1 = inlined_call_operand.vmem [shape: f32[16,32], index: 1, kind: input, shape index: {}]
  %s2 = inlined_call_operand.vmem [shape: f32[32,32], index: 2, kind: input, shape index: {}]
  %s3 = inlined_call_operand.vmem [shape: f32[1,32], index: 3, kind: input, shape index: {}]
  %s4 = inlined_call_operand.vmem [shape: f32[1,32], index: 4, kind: input, shape index: {}]
  %s5 = inlined_call_operand.vmem [shape: f32[1,32], index: 5, kind: input, shape index: {}]
  %s6 = inlined_call_operand.vmem [shape: f32[16,32], index: 6, kind: output, shape index: {}]
  %s7 = sld [smem:[#allocation0]]
  $region34: #{bert_layer.6} parent=0
    _
  %s9 = ssub.s32 1, %s7
  %s10 = scalar_select 0, %s9, %s7
  // Predicated region
  $region2: #{bert_layer.6} parent=0 // pred_check
    _
  $region3: #{bert_layer.6} parent=0 // pred_check_branch
    %12 = sbr.rel (0) target = $region5
  $region4: #{bert_layer.6} parent=0 // pred_region
    _
  $region5: #{bert_layer.6} parent=0 // pred_fallthru
    _
  // Predicated region
  $region6: #{bert_layer.6} parent=0 // pred_check
    _
  $region7: #{bert_layer.6} parent=0 // pred_check_branch
    %14 = sbr.rel (0) target = $region9
  $region8: #{bert_layer.6} parent=0 // pred_region
    _
  $region9: #{bert_layer.6} parent=0 // pred_fallthru
    _
  // Predicated region
  $region10: #{bert_layer.6} parent=0 // pred_check
    _
  $region11: #{bert_layer.6} parent=0 // pred_check_branch
    %16 = sbr.rel (0) target = $region13
  $region12: #{bert_layer.6} parent=0 // pred_region
    _
  $region13: #{bert_layer.6} parent=0 // pred_fallthru
    _
  // Predicated region
  $region14: #{bert_layer.6} parent=0 // pred_check
    _
  $region15: #{bert_layer.6} parent=0 // pred_check_branch
    %18 = sbr.rel (0) target = $region17
  $region16: #{bert_layer.6} parent=0 // pred_region
    _
  $region17: #{bert_layer.6} parent=0 // pred_fallthru
    _
  // Predicated region
  $region18: #{bert_layer.6} parent=0 // pred_check
    _
  $region19: #{bert_layer.6} parent=0 // pred_check_branch
    %20 = sbr.rel (0) target = $region21
  $region20: #{bert_layer.6} parent=0 // pred_region
    _
  $region21: #{bert_layer.6} parent=0 // pred_fallthru
    _
  // Predicated region
  $region22: #{bert_layer.6} parent=0 // pred_check
    _
  $region23: #{bert_layer.6} parent=0 // pred_check_branch
    %22 = sbr.rel (0) target = $region25
  $region24: #{bert_layer.6} parent=0 // pred_region
    _
  $region25: #{bert_layer.6} parent=0 // pred_fallthru
    _
  %v23 = vld [vmem:[%s0] sm:$0xff]
  %v24 = vld [vmem:[%s0 + $0x8] sm:$0xff]
  %v25 = vld [vmem:[%s2] sm:$0xff]
  %v26 = vld [vmem:[%s2 + $0x8] sm:$0xff]
  %v27 = vld [vmem:[%s2 + $0x10] sm:$0xff]
  %v28 = vld [vmem:[%s2 + $0x18] sm:$0xff]
  %v29 = vld [vmem:[%s3] sm:$0x1]
  %v31 = vlaneseq
  %v32 = vshrl.u32 %v31, 7
  %v33 = vsub.s32 0, %v32
  %v34 = vrot.slane %v29, %v33
  %vm36 = vcmask 261120
  %v38 = vsel %vm36, %v23, 0
  %v41 = vsel %vm36, %v24, 0
  %43 = vmatprep.subr.mxu0 0.0
  %44 = vmatpush1.msra.mxu0 0.0
  %45 = vmatprep.subr.mxu0 0.0
  %46 = vmatpush1.msra.mxu0 0.0
  %47 = vmatprep.subr.mxu0 0.0
  %48 = vmatpush1.msra.mxu0 0.0
  %49 = vmatprep.subr.mxu0 0.0
  %50 = vmatpush1.msra.mxu0 0.0
  %51 = vmatprep.subr.mxu0 0.0
  %52 = vmatpush1.msra.mxu0 0.0
  %53 = vmatprep.subr.mxu0 0.0
  %54 = vmatpush1.msra.mxu0 0.0
  %55 = vmatprep.subr.mxu0 0.0
  %56 = vmatpush1.msra.mxu0 0.0
  %57 = vmatprep.subr.mxu0 0.0
  %58 = vmatpush1.msra.mxu0 0.0
  %59 = vmatprep.subr.mxu0 0.0
  %60 = vmatpush1.msra.mxu0 0.0
  %61 = vmatprep.subr.mxu0 0.0
  %62 = vmatpush1.msra.mxu0 0.0
  %63 = vmatprep.subr.mxu0 0.0
  %64 = vmatpush1.msra.mxu0 0.0
  %65 = vmatprep.subr.mxu0 0.0
  %66 = vmatpush1.msra.mxu0 0.0
  %67 = vmatprep.subr.mxu0 0.0
  %68 = vmatpush1.msra.mxu0 %v28
  %69 = vmatprep.subr.mxu0 0.0
  %70 = vmatpush1.msra.mxu0 %v27
  %71 = vmatprep.subr.mxu0 0.0
  %72 = vmatpush1.msra.mxu0 %v26
  %73 = vmatprep.subr.mxu0 0.0
  %74 = vmatpush1.msra.mxu0 %v25
  %75 = vmatprep.subr.mxu0 0.0
  %76 = vmatpush2.msra.mxu0 0.0
  %77 = vmatprep.subr.mxu0 0.0
  %78 = vmatpush2.msra.mxu0 0.0
  %79 = vmatprep.subr.mxu0 0.0
  %80 = vmatpush2.msra.mxu0 0.0
  %81 = vmatprep.subr.mxu0 0.0
  %82 = vmatpush2.msra.mxu0 0.0
  %83 = vmatprep.subr.mxu0 0.0
  %84 = vmatpush2.msra.mxu0 0.0
  %85 = vmatprep.subr.mxu0 0.0
  %86 = vmatpush2.msra.mxu0 0.0
  %87 = vmatprep.subr.mxu0 0.0
  %88 = vmatpush2.msra.mxu0 0.0
  %89 = vmatprep.subr.mxu0 0.0
  %90 = vmatpush2.msra.mxu0 0.0
  %91 = vmatprep.subr.mxu0 0.0
  %92 = vmatpush2.msra.mxu0 0.0
  %93 = vmatprep.subr.mxu0 0.0
  %94 = vmatpush2.msra.mxu0 0.0
  %95 = vmatprep.subr.mxu0 0.0
  %96 = vmatpush2.msra.mxu0 0.0
  %97 = vmatprep.subr.mxu0 0.0
  %98 = vmatpush2.msra.mxu0 0.0
  %99 = vmatprep.subr.mxu0 0.0
  %100 = vmatpush2.msra.mxu0 0.0
  %101 = vmatprep.subr.mxu0 0.0
  %102 = vmatpush2.msra.mxu0 0.0
  %103 = vmatprep.subr.mxu0 0.0
  %104 = vmatpush2.msra.mxu0 0.0
  %105 = vmatprep.subr.mxu0 0.0
  %106 = vmatpush2.msra.mxu0 0.0
  %107 = vmatprep.mubr.f32.mxu0 0.0
  %108 = vmatmul.mubr.f32.gmra.mxu0 %v38
  %v109 = vpop.f32.mrf.mxu0
  %v110 = vadd.f32 %v34, %v109
  %v111 = vpop.f32.mrf.mxu0
  %112 = vmatprep.mubr.f32.mxu0 0.0
  %113 = vmatmul.mubr.f32.gmra.mxu0 %v41
  %v114 = vpop.f32.mrf.mxu0
  %v115 = vadd.f32 %v34, %v114
  %v116 = vpop.f32.mrf.mxu0
  %117 = vdwg.mxu0
  %v118 = vld [vmem:[%s1] sm:$0xff]
  %v119 = vld [vmem:[%s1 + $0x8] sm:$0xff]
  %v120 = vadd.f32 %v110, %v118
  %v121 = vadd.f32 %v115, %v119
  %v122 = vsel %vm36, %v120, 0.0
  %123 = vadd.xlane.f32.xlu0 %v122
  %v124 = vpop.xlane.xlu0 %123
  %v125 = vsel %vm36, %v121, 0.0
  %126 = vadd.xlane.f32.xlu0 %v125
  %v127 = vpop.xlane.xlu0 %126
  %v128 = vrcp.pop 32.0
  %v129 = vmul.f32 %v124, %v128
  %v130 = vmul.f32 %v127, %v128
  %v131 = vsub.f32 %v120, %v129
  %v132 = vsub.f32 %v121, %v130
  %v133 = vmul.f32 %v131, %v131
  %v134 = vmul.f32 %v132, %v132
  %v135 = vsel %vm36, %v133, 0.0
  %136 = vadd.xlane.f32.xlu0 %v135
  %v137 = vpop.xlane.xlu0 %136
  %v138 = vsel %vm36, %v134, 0.0
  %139 = vadd.xlane.f32.xlu0 %v138
  %v140 = vpop.xlane.xlu0 %139
  %v141 = vmul.f32 %v137, %v128
  %v142 = vmul.f32 %v140, %v128
  %v143 = vadd.f32 %v141, 1e-12
  %v144 = vadd.f32 %v142, 1e-12
  %v145 = vrsqrt.pop %v143
  %v146 = vrsqrt.pop %v144
  %v147 = vmul.f32 %v131, %v145
  %v148 = vmul.f32 %v132, %v146
  %v149 = vld [vmem:[%s4] sm:$0x1]
  %v151 = vlaneseq
  %v152 = vshrl.u32 %v151, 7
  %v153 = vsub.s32 0, %v152
  %v154 = vrot.slane %v149, %v153
  %v156 = vmul.f32 %v147, %v154
  %v157 = vmul.f32 %v148, %v154
  %v158 = vld [vmem:[%s5] sm:$0x1]
  %v160 = vlaneseq
  %v161 = vshrl.u32 %v160, 7
  %v162 = vsub.s32 0, %v161
  %v163 = vrot.slane %v158, %v162
  %v165 = vadd.f32 %v156, %v163
  %v166 = vadd.f32 %v157, %v163
  %167 = vst.msk [vmem:[%s6] sm:$0xff] %vm36, %v165
  %168 = vst.msk [vmem:[%s6 + $0x8] sm:$0xff] %vm36, %v166
  // Predicated region
  $region26: #{bert_layer.6} parent=0 // pred_check
    _
  $region27: #{bert_layer.6} parent=0 // pred_check_branch
    %170 = sbr.rel (0) target = $region29
  $region28: #{bert_layer.6} parent=0 // pred_region
    _
  $region29: #{bert_layer.6} parent=0 // pred_fallthru
    _
  // Predicated region
  $region30: #{bert_layer.6} parent=0 // pred_check
    _
  $region31: #{bert_layer.6} parent=0 // pred_check_branch
    %172 = sbr.rel (0) target = $region33
  $region32: #{bert_layer.6} parent=0 // pred_region
    _
  $region33: #{bert_layer.6} parent=0 // pred_fallthru
    _

// kernel: bert_layer.7
$region0: #{bert_layer.7}
  #allocation0 [shape = 'u32[]', space=smem, size = 0x4, offset = 0x4, fixed_abs, tag = 'smem constant byte address 0x4 - core index']
  #allocation1 [shape = 'u32[144,128]{1,0:T(1,128)}', space=vmem, size = 0x12000, scoped, tag = 'internal scratch']
  %s0 = inlined_call_operand.vmem [shape: f32[16,32], index: 0, kind: input, shape index: {}]
  %s1 = inlined_call_operand.vmem [shape: f32[32,128], index: 1, kind: input, shape index: {}]
  %s2 = inlined_call_operand.vmem [shape: f32[1,128], index: 2, kind: input, shape index: {}]
  %s3 = inlined_call_operand.vmem [shape: f32[128,32], index: 3, kind: input, shape index: {}]
  %s4 = inlined_call_operand.vmem [shape: f32[1,32], index: 4, kind: input, shape index: {}]
  %s5 = inlined_call_operand.vmem [shape: f32[1,32], index: 5, kind: input, shape index: {}]
  %s6 = inlined_call_operand.vmem [shape: f32[1,32], index: 6, kind: input, shape index: {}]
  %s7 = inlined_call_operand.hbm [shape: f32[16,32], index: 7, kind: output, shape index: {}]
  %s8 = sld [smem:[#allocation0]]
  $region38: #{bert_layer.7} parent=0
    _
  %s10 = ssub.s32 1, %s8
  %s11 = scalar_select 0, %s10, %s8
  $region1: #{bert_layer.7} parent=0
    #allocation2 [shape = 'u8[8192]{0}', space=vmem, size = 0x2000, scoped, tag = 'output window, operand 0, single buffered']
    #allocation3 [shape = 's32[1]{0}', space=sflag, size = 0x4, scoped, tag = 'scoped memory for bert_layer.7']
    %12 = vsyncpa [#allocation3], 0
    // Predicated region
    $region2: #{bert_layer.7} parent=1 // pred_check
      _
    $region3: #{bert_layer.7} parent=1 // pred_check_branch
      %14 = sbr.rel (0) target = $region5
    $region4: #{bert_layer.7} parent=1 // pred_region
      _
    $region5: #{bert_layer.7} parent=1 // pred_fallthru
      _
    // Predicated region
    $region6: #{bert_layer.7} parent=1 // pred_check
      _
    $region7: #{bert_layer.7} parent=1 // pred_check_branch
      %16 = sbr.rel (0) target = $region9
    $region8: #{bert_layer.7} parent=1 // pred_region
      _
    $region9: #{bert_layer.7} parent=1 // pred_fallthru
      _
    // Predicated region
    $region10: #{bert_layer.7} parent=1 // pred_check
      _
    $region11: #{bert_layer.7} parent=1 // pred_check_branch
      %18 = sbr.rel (0) target = $region13
    $region12: #{bert_layer.7} parent=1 // pred_region
      _
    $region13: #{bert_layer.7} parent=1 // pred_fallthru
      _
    // Predicated region
    $region14: #{bert_layer.7} parent=1 // pred_check
      _
    $region15: #{bert_layer.7} parent=1 // pred_check_branch
      %20 = sbr.rel (0) target = $region17
    $region16: #{bert_layer.7} parent=1 // pred_region
      _
    $region17: #{bert_layer.7} parent=1 // pred_fallthru
      _
    // Predicated region
    $region18: #{bert_layer.7} parent=1 // pred_check
      _
    $region19: #{bert_layer.7} parent=1 // pred_check_branch
      %22 = sbr.rel (0) target = $region21
    $region20: #{bert_layer.7} parent=1 // pred_region
      _
    $region21: #{bert_layer.7} parent=1 // pred_fallthru
      _
    // Predicated region
    $region22: #{bert_layer.7} parent=1 // pred_check
      _
    $region23: #{bert_layer.7} parent=1 // pred_check_branch
      %24 = sbr.rel (0) target = $region25
    $region24: #{bert_layer.7} parent=1 // pred_region
      _
    $region25: #{bert_layer.7} parent=1 // pred_fallthru
      _
    // Predicated region
    $region26: #{bert_layer.7} parent=1 // pred_check
      _
    $region27: #{bert_layer.7} parent=1 // pred_check_branch
      %26 = sbr.rel (0) target = $region29
    $region28: #{bert_layer.7} parent=1 // pred_region
      _
    $region29: #{bert_layer.7} parent=1 // pred_fallthru
      _
    %v27 = vld [vmem:[%s0] sm:$0xff]
    %v28 = vld [vmem:[%s0 + $0x8] sm:$0xff]
    %v29 = vld [vmem:[%s1] sm:$0xff]
    %v30 = vld [vmem:[%s1 + $0x8] sm:$0xff]
    %v31 = vld [vmem:[%s1 + $0x10] sm:$0xff]
    %v32 = vld [vmem:[%s1 + $0x18] sm:$0xff]
    %v33 = vld [vmem:[%s2] sm:$0x1]
    %v35 = vlaneseq
    %v36 = vshrl.u32 %v35, 7
    %v37 = vsub.s32 0, %v36
    %v38 = vrot.slane %v33, %v37
    %vm40 = vcmask 261120
    %v42 = vsel %vm40, %v27, 0
    %v45 = vsel %vm40, %v28, 0
    %47 = vmatprep.subr.mxu0 0.0
    %48 = vmatpush1.msra.mxu0 0.0
    %49 = vmatprep.subr.mxu0 0.0
    %50 = vmatpush1.msra.mxu0 0.0
    %51 = vmatprep.subr.mxu0 0.0
    %52 = vmatpush1.msra.mxu0 0.0
    %53 = vmatprep.subr.mxu0 0.0
    %54 = vmatpush1.msra.mxu0 0.0
    %55 = vmatprep.subr.mxu0 0.0
    %56 = vmatpush1.msra.mxu0 0.0
    %57 = vmatprep.subr.mxu0 0.0
    %58 = vmatpush1.msra.mxu0 0.0
    %59 = vmatprep.subr.mxu0 0.0
    %60 = vmatpush1.msra.mxu0 0.0
    %61 = vmatprep.subr.mxu0 0.0
    %62 = vmatpush1.msra.mxu0 0.0
    %63 = vmatprep.subr.mxu0 0.0
    %64 = vmatpush1.msra.mxu0 0.0
    %65 = vmatprep.subr.mxu0 0.0
    %66 = vmatpush1.msra.mxu0 0.0
    %67 = vmatprep.subr.mxu0 0.0
    %68 = vmatpush1.msra.mxu0 0.0
    %69 = vmatprep.subr.mxu0 0.0
    %70 = vmatpush1.msra.mxu0 0.0
    %71 = vmatprep.subr.mxu0 0.0
    %72 = vmatpush1.msra.mxu0 %v32
    %73 = vmatprep.subr.mxu0 0.0
    %74 = vmatpush1.msra.mxu0 %v31
    %75 = vmatprep.subr.mxu0 0.0
    %76 = vmatpush1.msra.mxu0 %v30
    %77 = vmatprep.subr.mxu0 0.0
    %78 = vmatpush1.msra.mxu0 %v29
    %79 = vmatprep.subr.mxu0 0.0
    %80 = vmatpush2.msra.mxu0 0.0
    %81 = vmatprep.subr.mxu0 0.0
    %82 = vmatpush2.msra.mxu0 0.0
    %83 = vmatprep.subr.mxu0 0.0
    %84 = vmatpush2.msra.mxu0 0.0
    %85 = vmatprep.subr.mxu0 0.0
    %86 = vmatpush2.msra.mxu0 0.0
    %87 = vmatprep.subr.mxu0 0.0
    %88 = vmatpush2.msra.mxu0 0.0
    %89 = vmatprep.subr.mxu0 0.0
    %90 = vmatpush2.msra.mxu0 0.0
    %91 = vmatprep.subr.mxu0 0.0
    %92 = vmatpush2.msra.mxu0 0.0
    %93 = vmatprep.subr.mxu0 0.0
    %94 = vmatpush2.msra.mxu0 0.0
    %95 = vmatprep.subr.mxu0 0.0
    %96 = vmatpush2.msra.mxu0 0.0
    %97 = vmatprep.subr.mxu0 0.0
    %98 = vmatpush2.msra.mxu0 0.0
    %99 = vmatprep.subr.mxu0 0.0
    %100 = vmatpush2.msra.mxu0 0.0
    %101 = vmatprep.subr.mxu0 0.0
    %102 = vmatpush2.msra.mxu0 0.0
    %103 = vmatprep.subr.mxu0 0.0
    %104 = vmatpush2.msra.mxu0 0.0
    %105 = vmatprep.subr.mxu0 0.0
    %106 = vmatpush2.msra.mxu0 0.0
    %107 = vmatprep.subr.mxu0 0.0
    %108 = vmatpush2.msra.mxu0 0.0
    %109 = vmatprep.subr.mxu0 0.0
    %110 = vmatpush2.msra.mxu0 0.0
    %111 = vmatprep.mubr.f32.mxu0 0.0
    %112 = vmatmul.mubr.f32.gmra.mxu0 %v42
    %v113 = vpop.f32.mrf.mxu0
    %v114 = vadd.f32 %v38, %v113
    %v115 = vpop.f32.mrf.mxu0
    %116 = vmatprep.mubr.f32.mxu0 0.0
    %117 = vmatmul.mubr.f32.gmra.mxu0 %v45
    %v118 = vpop.f32.mrf.mxu0
    %v119 = vadd.f32 %v38, %v118
    %v120 = vpop.f32.mrf.mxu0
    %121 = vdwg.mxu0
    %v122 = vmul.f32 %v114, 0.5
    %v123 = vmul.f32 %v119, 0.5
    %v124 = vmul.f32 %v114, 0.70710677
    %v125 = vmul.f32 %v119, 0.70710677
    %v126 = verf.f32.pop %v124
    %v127 = verf.f32.pop %v125
    %v128 = vadd.f32 %v126, 1.0
    %v129 = vadd.f32 %v127, 1.0
    %v130 = vmul.f32 %v122, %v128
    %v131 = vmul.f32 %v123, %v129
    %v132 = vld [vmem:[%s3] sm:$0xff]
    %v133 = vld [vmem:[%s3 + $0x8] sm:$0xff]
    %v134 = vld [vmem:[%s3 + $0x10] sm:$0xff]
    %v135 = vld [vmem:[%s3 + $0x18] sm:$0xff]
    %v136 = vld [vmem:[%s3 + $0x20] sm:$0xff]
    %v137 = vld [vmem:[%s3 + $0x28] sm:$0xff]
    %v138 = vld [vmem:[%s3 + $0x30] sm:$0xff]
    %v139 = vld [vmem:[%s3 + $0x38] sm:$0xff]
    %v140 = vld [vmem:[%s3 + $0x40] sm:$0xff]
    %v141 = vld [vmem:[%s3 + $0x48] sm:$0xff]
    %v142 = vld [vmem:[%s3 + $0x50] sm:$0xff]
    %v143 = vld [vmem:[%s3 + $0x58] sm:$0xff]
    %v144 = vld [vmem:[%s3 + $0x60] sm:$0xff]
    %v145 = vld [vmem:[%s3 + $0x68] sm:$0xff]
    %v146 = vld [vmem:[%s3 + $0x70] sm:$0xff]
    %v147 = vld [vmem:[%s3 + $0x78] sm:$0xff]
    %v148 = vld [vmem:[%s4] sm:$0x1]
    %v150 = vlaneseq
    %v151 = vshrl.u32 %v150, 7
    %v152 = vsub.s32 0, %v151
    %v153 = vrot.slane %v148, %v152
    %155 = vmatprep.subr.mxu0 0.0
    %156 = vmatpush1.msra.mxu0 %v147
    %157 = vmatprep.subr.mxu0 0.0
    %158 = vmatpush1.msra.mxu0 %v146
    %159 = vmatprep.subr.mxu0 0.0
    %160 = vmatpush1.msra.mxu0 %v145
    %161 = vmatprep.subr.mxu0 0.0
    %162 = vmatpush1.msra.mxu0 %v144
    %163 = vmatprep.subr.mxu0 0.0
    %164 = vmatpush1.msra.mxu0 %v143
    %165 = vmatprep.subr.mxu0 0.0
    %166 = vmatpush1.msra.mxu0 %v142
    %167 = vmatprep.subr.mxu0 0.0
    %168 = vmatpush1.msra.mxu0 %v141
    %169 = vmatprep.subr.mxu0 0.0
    %170 = vmatpush1.msra.mxu0 %v140
    %171 = vmatprep.subr.mxu0 0.0
    %172 = vmatpush1.msra.mxu0 %v139
    %173 = vmatprep.subr.mxu0 0.0
    %174 = vmatpush1.msra.mxu0 %v138
    %175 = vmatprep.subr.mxu0 0.0
    %176 = vmatpush1.msra.mxu0 %v137
    %177 = vmatprep.subr.mxu0 0.0
    %178 = vmatpush1.msra.mxu0 %v136
    %179 = vmatprep.subr.mxu0 0.0
    %180 = vmatpush1.msra.mxu0 %v135
    %181 = vmatprep.subr.mxu0 0.0
    %182 = vmatpush1.msra.mxu0 %v134
    %183 = vmatprep.subr.mxu0 0.0
    %184 = vmatpush1.msra.mxu0 %v133
    %185 = vmatprep.subr.mxu0 0.0
    %186 = vmatpush1.msra.mxu0 %v132
    %187 = vmatprep.subr.mxu0 0.0
    %188 = vmatpush2.msra.mxu0 0.0
    %189 = vmatprep.subr.mxu0 0.0
    %190 = vmatpush2.msra.mxu0 0.0
    %191 = vmatprep.subr.mxu0 0.0
    %192 = vmatpush2.msra.mxu0 0.0
    %193 = vmatprep.subr.mxu0 0.0
    %194 = vmatpush2.msra.mxu0 0.0
    %195 = vmatprep.subr.mxu0 0.0
    %196 = vmatpush2.msra.mxu0 0.0
    %197 = vmatprep.subr.mxu0 0.0
    %198 = vmatpush2.msra.mxu0 0.0
    %199 = vmatprep.subr.mxu0 0.0
    %200 = vmatpush2.msra.mxu0 0.0
    %201 = vmatprep.subr.mxu0 0.0
    %202 = vmatpush2.msra.mxu0 0.0
    %203 = vmatprep.subr.mxu0 0.0
    %204 = vmatpush2.msra.mxu0 0.0
    %205 = vmatprep.subr.mxu0 0.0
    %206 = vmatpush2.msra.mxu0 0.0
    %207 = vmatprep.subr.mxu0 0.0
    %208 = vmatpush2.msra.mxu0 0.0
    %209 = vmatprep.subr.mxu0 0.0
    %210 = vmatpush2.msra.mxu0 0.0
    %211 = vmatprep.subr.mxu0 0.0
    %212 = vmatpush2.msra.mxu0 0.0
    %213 = vmatprep.subr.mxu0 0.0
    %214 = vmatpush2.msra.mxu0 0.0
    %215 = vmatprep.subr.mxu0 0.0
    %216 = vmatpush2.msra.mxu0 0.0
    %217 = vmatprep.subr.mxu0 0.0
    %218 = vmatpush2.msra.mxu0 0.0
    %219 = vmatprep.mubr.f32.mxu0 0.0
    %220 = vmatmul.mubr.f32.gmra.mxu0 %v130
    %v221 = vpop.f32.mrf.mxu0
    %v222 = vadd.f32 %v153, %v221
    %v223 = vpop.f32.mrf.mxu0
    %224 = vmatprep.mubr.f32.mxu0 0.0
    %225 = vmatmul.mubr.f32.gmra.mxu0 %v131
    %v226 = vpop.f32.mrf.mxu0
    %v227 = vadd.f32 %v153, %v226
    %v228 = vpop.f32.mrf.mxu0
    %229 = vdwg.mxu0
    %v230 = vadd.f32 %v222, %v27
    %v231 = vadd.f32 %v227, %v28
    %v232 = vsel %vm40, %v230, 0.0
    %233 = vadd.xlane.f32.xlu0 %v232
    %v234 = vpop.xlane.xlu0 %233
    %v235 = vsel %vm40, %v231, 0.0
    %236 = vadd.xlane.f32.xlu0 %v235
    %v237 = vpop.xlane.xlu0 %236
    %v238 = vrcp.pop 32.0
    %v239 = vmul.f32 %v234, %v238
    %v240 = vmul.f32 %v237, %v238
    %v241 = vsub.f32 %v230, %v239
    %v242 = vsub.f32 %v231, %v240
    %v243 = vmul.f32 %v241, %v241
    %v244 = vmul.f32 %v242, %v242
    %v245 = vsel %vm40, %v243, 0.0
    %246 = vadd.xlane.f32.xlu0 %v245
    %v247 = vpop.xlane.xlu0 %246
    %v248 = vsel %vm40, %v244, 0.0
    %249 = vadd.xlane.f32.xlu0 %v248
    %v250 = vpop.xlane.xlu0 %249
    %v251 = vmul.f32 %v247, %v238
    %v252 = vmul.f32 %v250, %v238
    %v253 = vadd.f32 %v251, 1e-12
    %v254 = vadd.f32 %v252, 1e-12
    %v255 = vrsqrt.pop %v253
    %v256 = vrsqrt.pop %v254
    %v257 = vmul.f32 %v241, %v255
    %v258 = vmul.f32 %v242, %v256
    %v259 = vld [vmem:[%s5] sm:$0x1]
    %v261 = vlaneseq
    %v262 = vshrl.u32 %v261, 7
    %v263 = vsub.s32 0, %v262
    %v264 = vrot.slane %v259, %v263
    %v266 = vmul.f32 %v257, %v264
    %v267 = vmul.f32 %v258, %v264
    %v268 = vld [vmem:[%s6] sm:$0x1]
    %v270 = vlaneseq
    %v271 = vshrl.u32 %v270, 7
    %v272 = vsub.s32 0, %v271
    %v273 = vrot.slane %v268, %v272
    %v275 = vadd.f32 %v266, %v273
    %v276 = vadd.f32 %v267, %v273
    %277 = vst.msk [vmem:[#allocation2] sm:$0xff] %vm40, %v275
    %278 = vst.msk [vmem:[#allocation2 + $0x8] sm:$0xff] %vm40, %v276
    // Predicated region
    $region30: #{bert_layer.7} parent=1 // pred_check
      _
    $region31: #{bert_layer.7} parent=1 // pred_check_branch
      %280 = sbr.rel (0) target = $region33
    $region32: #{bert_layer.7} parent=1 // pred_region
      %s282 = ssub.s32 256, 256
      %283 = vsyncadd [#allocation3], %s282
      %s284 = sshll.u32 [#allocation2], 4
      %s285 = int_to_ptr.vmem [resolvable:$true] %s284
      %290 = dma.vmem_to_hbm [thread:$0]  %s285, 256, %s7, [#allocation3], 128, 128, 8
    $region33: #{bert_layer.7} parent=1 // pred_fallthru
      _
    // Predicated region
    $region34: #{bert_layer.7} parent=1 // pred_check
      _
    $region35: #{bert_layer.7} parent=1 // pred_check_branch
      %292 = sbr.rel (0) target = $region37
    $region36: #{bert_layer.7} parent=1 // pred_region
      %293 = dma.done [#allocation3], 256
    $region37: #{bert_layer.7} parent=1 // pred_fallthru
      _
    %294 = vsyncpa [#allocation3], 1

// kernel: bert_layer.5
$region0: #{bert_layer.5}
  #allocation0 [shape = 'u32[]', space=smem, size = 0x4, offset = 0x4, fixed_abs, tag = 'smem constant byte address 0x4 - core index']
  #allocation1 [shape = 'u32[144,128]{1,0:T(1,128)}', space=vmem, size = 0x12000, scoped, tag = 'internal scratch']
  %s0 = inlined_call_operand.vmem [shape: f32[2,8,32], index: 0, kind: input, shape index: {}]
  %s1 = inlined_call_operand.vmem [shape: f32[2,8,32], index: 1, kind: input, shape index: {}]
  %s2 = inlined_call_operand.vmem [shape: f32[2,8,32], index: 2, kind: input, shape index: {}]
  %s3 = inlined_call_operand.vmem [shape: f32[2,1,8], index: 3, kind: input, shape index: {}]
  %s4 = inlined_call_operand.vmem [shape: f32[2,8,32], index: 4, kind: output, shape index: {}]
  %s5 = sld [smem:[#allocation0]]
  $region49: #{bert_layer.5} parent=0
    _
  %s7 = ssub.s32 1, %s5
  %s8 = scalar_select 0, %s7, %s5
  loop: start=0, step=1, limit=4
  $region2: #{bert_layer.5} parent=0 // loop_pre_header
    _
  $region3: #{bert_layer.5} parent=0 // loop_header
    %s10 = sphi 0, %s14
    %p11 = scmp.ge.s32.totalorder %s10, 4
    %s17 = sphi 0, %s29
    %s18 = sphi 0, %s25
    %s19 = sphi 0, %s17
    %s20 = sphi 0, %s18
    %s21 = sphi 0, %s19
    %s22 = sphi 0, %s20
    %s34 = sphi 0, %s36
    %s37 = sphi 0, %s34
    %s38 = sphi 0, %s37
    %s54 = sphi 0, %s38
    %s62 = sphi 0, %s64
    %s65 = sphi 0, %s62
    %s66 = sphi 0, %s65
    %s82 = sphi 0, %s66
    %s90 = sphi 0, %s92
    %s93 = sphi 0, %s90
    %s94 = sphi 0, %s93
    %s110 = sphi 0, %s94
    %s116 = sphi 0, %s118
    %s119 = sphi 0, %s116
    %s120 = sphi 0, %s119
    %s136 = sphi 0, %s120
    %s144 = sphi 0, %s146
    %s147 = sphi 0, %s144
    %s148 = sphi 0, %s147
    %s164 = sphi 0, %s148
  $region4: #{bert_layer.5} parent=0 // loop_header_branch
    %13 = sbr.rel (%p11) target = $region8
  $region5: #{bert_layer.5} parent=0 // loop_body
    %s15 = ssub.s32 %s10, 1
    %s16 = ssub.s32 %s10, 2
    %s23 = sadd.s32 1, %s18
    %p24 = scmp.ge.s32.totalorder %s23, 1
    %s25 = scalar_select %p24, 0, %s23
    %s26 = sadd.s32 1, %s17
    %s27 = scalar_select %p24, %s26, %s17
    %p28 = scmp.ge.s32.totalorder %s27, 2
    %s29 = scalar_select %p28, 0, %s27
    %s30 = ssub.s32 %s17, %s29
    %s31 = ssub.s32 %s18, %s25
    %s32 = sor.u32 %s30, %s31
    %p33 = scmp.eq.s32.totalorder %s32, 0
    %s35 = sadd.s32 %s34, 1
    %s36 = scalar_select %p33, %s34, %s35
    %p39 = pneg %p33
    %p40 = scmp.eq.s32.totalorder %s10, 1
    %p41 = por %p39, %p40
    %p42 = scmp.ne.s32.totalorder %s34, %s37
    %p43 = scmp.eq.s32.totalorder %s10, 0
    %p44 = por %p42, %p43
    %p45 = scmp.ne.s32.totalorder %s34, %s37
    %p46 = scmp.eq.s32.totalorder %s15, 1
    %p47 = por %p45, %p46
    %p48 = scmp.ne.s32.totalorder %s37, %s38
    %p49 = scmp.eq.s32.totalorder %s15, 0
    %p50 = por %p48, %p49
    %p51 = scmp.ne.s32.totalorder %s37, %s38
    %p52 = scmp.eq.s32.totalorder %s16, 1
    %p53 = por %p51, %p52
    %p55 = scmp.ne.s32.totalorder %s38, %s54
    %p56 = scmp.eq.s32.totalorder %s16, 0
    %p57 = por %p55, %p56
    %s58 = ssub.s32 %s17, %s29
    %s59 = ssub.s32 %s18, %s25
    %s60 = sor.u32 %s58, %s59
    %p61 = scmp.eq.s32.totalorder %s60, 0
    %s63 = sadd.s32 %s62, 1
    %s64 = scalar_select %p61, %s62, %s63
    %p67 = pneg %p61
    %p68 = scmp.eq.s32.totalorder %s10, 1
    %p69 = por %p67, %p68
    %p70 = scmp.ne.s32.totalorder %s62, %s65
    %p71 = scmp.eq.s32.totalorder %s10, 0
    %p72 = por %p70, %p71
    %p73 = scmp.ne.s32.totalorder %s62, %s65
    %p74 = scmp.eq.s32.totalorder %s15, 1
    %p75 = por %p73, %p74
    %p76 = scmp.ne.s32.totalorder %s65, %s66
    %p77 = scmp.eq.s32.totalorder %s15, 0
    %p78 = por %p76, %p77
    %p79 = scmp.ne.s32.totalorder %s65, %s66
    %p80 = scmp.eq.s32.totalorder %s16, 1
    %p81 = por %p79, %p80
    %p83 = scmp.ne.s32.totalorder %s66, %s82
    %p84 = scmp.eq.s32.totalorder %s16, 0
    %p85 = por %p83, %p84
    %s86 = ssub.s32 %s17, %s29
    %s87 = ssub.s32 %s18, %s25
    %s88 = sor.u32 %s86, %s87
    %p89 = scmp.eq.s32.totalorder %s88, 0
    %s91 = sadd.s32 %s90, 1
    %s92 = scalar_select %p89, %s90, %s91
    %p95 = pneg %p89
    %p96 = scmp.eq.s32.totalorder %s10, 1
    %p97 = por %p95, %p96
    %p98 = scmp.ne.s32.totalorder %s90, %s93
    %p99 = scmp.eq.s32.totalorder %s10, 0
    %p100 = por %p98, %p99
    %p101 = scmp.ne.s32.totalorder %s90, %s93
    %p102 = scmp.eq.s32.totalorder %s15, 1
    %p103 = por %p101, %p102
    %p104 = scmp.ne.s32.totalorder %s93, %s94
    %p105 = scmp.eq.s32.totalorder %s15, 0
    %p106 = por %p104, %p105
    %p107 = scmp.ne.s32.totalorder %s93, %s94
    %p108 = scmp.eq.s32.totalorder %s16, 1
    %p109 = por %p107, %p108
    %p111 = scmp.ne.s32.totalorder %s94, %s110
    %p112 = scmp.eq.s32.totalorder %s16, 0
    %p113 = por %p111, %p112
    %s114 = ssub.s32 %s17, %s29
    %p115 = scmp.eq.s32.totalorder %s114, 0
    %s117 = sadd.s32 %s116, 1
    %s118 = scalar_select %p115, %s116, %s117
    %p121 = pneg %p115
    %p122 = scmp.eq.s32.totalorder %s10, 1
    %p123 = por %p121, %p122
    %p124 = scmp.ne.s32.totalorder %s116, %s119
    %p125 = scmp.eq.s32.totalorder %s10, 0
    %p126 = por %p124, %p125
    %p127 = scmp.ne.s32.totalorder %s116, %s119
    %p128 = scmp.eq.s32.totalorder %s15, 1
    %p129 = por %p127, %p128
    %p130 = scmp.ne.s32.totalorder %s119, %s120
    %p131 = scmp.eq.s32.totalorder %s15, 0
    %p132 = por %p130, %p131
    %p133 = scmp.ne.s32.totalorder %s119, %s120
    %p134 = scmp.eq.s32.totalorder %s16, 1
    %p135 = por %p133, %p134
    %p137 = scmp.ne.s32.totalorder %s120, %s136
    %p138 = scmp.eq.s32.totalorder %s16, 0
    %p139 = por %p137, %p138
    %s140 = ssub.s32 %s17, %s29
    %s141 = ssub.s32 %s18, %s25
    %s142 = sor.u32 %s140, %s141
    %p143 = scmp.eq.s32.totalorder %s142, 0
    %s145 = sadd.s32 %s144, 1
    %s146 = scalar_select %p143, %s144, %s145
    %p149 = pneg %p143
    %p150 = scmp.eq.s32.totalorder %s10, 1
    %p151 = por %p149, %p150
    %p152 = scmp.ne.s32.totalorder %s144, %s147
    %p153 = scmp.eq.s32.totalorder %s10, 0
    %p154 = por %p152, %p153
    %p155 = scmp.ne.s32.totalorder %s144, %s147
    %p156 = scmp.eq.s32.totalorder %s15, 1
    %p157 = por %p155, %p156
    %p158 = scmp.ne.s32.totalorder %s147, %s148
    %p159 = scmp.eq.s32.totalorder %s15, 0
    %p160 = por %p158, %p159
    %p161 = scmp.ne.s32.totalorder %s147, %s148
    %p162 = scmp.eq.s32.totalorder %s16, 1
    %p163 = por %p161, %p162
    %p165 = scmp.ne.s32.totalorder %s148, %s164
    %p166 = scmp.eq.s32.totalorder %s16, 0
    %p167 = por %p165, %p166
    %p168 = scmp.le.s32.totalorder 1, %s10
    %p169 = scmp.lt.s32.totalorder %s10, 3
    %p170 = pnand %p168, %p169
    %p171 = pneg %p170
    // Predicated region
    $region9: #{bert_layer.5} parent=5 // pred_check
      _
    $region10: #{bert_layer.5} parent=5 // pred_check_branch
      %173 = sbr.rel (%p170) target = $region12
    $region11: #{bert_layer.5} parent=5 // pred_region
      %s174 = ssub.s32 %s10, 1
    $region12: #{bert_layer.5} parent=5 // pred_fallthru
      _
    %p175 = scmp.lt.s32.totalorder %s10, 2
    // Predicated region
    $region13: #{bert_layer.5} parent=5 // pred_check
      %p176 = pneg %p175
    $region14: #{bert_layer.5} parent=5 // pred_check_branch
      %178 = sbr.rel (%p176) target = $region16
    $region15: #{bert_layer.5} parent=5 // pred_region
      // Predicated region
      $region17: #{bert_layer.5} parent=15 // pred_check
        %p179 = pneg %p44
      $region18: #{bert_layer.5} parent=15 // pred_check_branch
        %181 = sbr.rel (%p179) target = $region20
      $region19: #{bert_layer.5} parent=15 // pred_region
        %p182 = scmp.lt.s32.totalorder %s17, 1
        %s183 = scalar_select %p182, %s17, 1
        %p184 = scmp.lt.s32.totalorder %s18, 0
        %s185 = scalar_select %p184, %s18, 0
        %s186 = sadd.s32 %s185, %s183
        %s187 = smul.addr %s186, 8
        %s188 = scalar_lea.vmem %s0, %s187
      $region20: #{bert_layer.5} parent=15 // pred_fallthru
        _
      // Predicated region
      $region21: #{bert_layer.5} parent=15 // pred_check
        %p189 = pneg %p72
      $region22: #{bert_layer.5} parent=15 // pred_check_branch
        %191 = sbr.rel (%p189) target = $region24
      $region23: #{bert_layer.5} parent=15 // pred_region
        %p192 = scmp.lt.s32.totalorder %s17, 1
        %s193 = scalar_select %p192, %s17, 1
        %p194 = scmp.lt.s32.totalorder %s18, 0
        %s195 = scalar_select %p194, %s18, 0
        %s196 = sadd.s32 %s195, %s193
        %s197 = smul.addr %s196, 8
        %s198 = scalar_lea.vmem %s1, %s197
      $region24: #{bert_layer.5} parent=15 // pred_fallthru
        _
      // Predicated region
      $region25: #{bert_layer.5} parent=15 // pred_check
        %p199 = pneg %p100
      $region26: #{bert_layer.5} parent=15 // pred_check_branch
        %201 = sbr.rel (%p199) target = $region28
      $region27: #{bert_layer.5} parent=15 // pred_region
        %p202 = scmp.lt.s32.totalorder %s17, 1
        %s203 = scalar_select %p202, %s17, 1
        %p204 = scmp.lt.s32.totalorder %s18, 0
        %s205 = scalar_select %p204, %s18, 0
        %s206 = sadd.s32 %s205, %s203
        %s207 = smul.addr %s206, 8
        %s208 = scalar_lea.vmem %s2, %s207
      $region28: #{bert_layer.5} parent=15 // pred_fallthru
        _
      // Predicated region
      $region29: #{bert_layer.5} parent=15 // pred_check
        %p209 = pneg %p126
      $region30: #{bert_layer.5} parent=15 // pred_check_branch
        %211 = sbr.rel (%p209) target = $region32
      $region31: #{bert_layer.5} parent=15 // pred_region
        %p212 = scmp.lt.s32.totalorder %s17, 1
        %s213 = scalar_select %p212, %s17, 1
        %s214 = scalar_lea.vmem %s3, %s213
      $region32: #{bert_layer.5} parent=15 // pred_fallthru
        _
    $region16: #{bert_layer.5} parent=5 // pred_fallthru
      _
    %p215 = scmp.le.s32.totalorder 1, %s10
    %p216 = scmp.lt.s32.totalorder %s10, 3
    %p217 = pnand %p215, %p216
    %p218 = pneg %p217
    // Predicated region
    $region33: #{bert_layer.5} parent=5 // pred_check
      _
    $region34: #{bert_layer.5} parent=5 // pred_check_branch
      %220 = sbr.rel (%p217) target = $region36
    $region35: #{bert_layer.5} parent=5 // pred_region
      %s221 = ssub.s32 %s10, 1
      %p222 = scmp.lt.s32.totalorder %s19, 1
      %s223 = scalar_select %p222, %s19, 1
      %p224 = scmp.lt.s32.totalorder %s20, 0
      %s225 = scalar_select %p224, %s20, 0
      %s226 = sadd.s32 %s225, %s223
      %s227 = smul.addr %s226, 8
      %s228 = scalar_lea.vmem %s0, %s227
      %p229 = pneg %p50
      %p230 = pneg %p47
      %p231 = scmp.lt.s32.totalorder %s19, 1
      %s232 = scalar_select %p231, %s19, 1
      %p233 = scmp.lt.s32.totalorder %s20, 0
      %s234 = scalar_select %p233, %s20, 0
      %s235 = sadd.s32 %s234, %s232
      %s236 = smul.addr %s235, 8
      %s237 = scalar_lea.vmem %s1, %s236
      %p238 = pneg %p78
      %p239 = pneg %p75
      %p240 = scmp.lt.s32.totalorder %s19, 1
      %s241 = scalar_select %p240, %s19, 1
      %p242 = scmp.lt.s32.totalorder %s20, 0
      %s243 = scalar_select %p242, %s20, 0
      %s244 = sadd.s32 %s243, %s241
      %s245 = smul.addr %s244, 8
      %s246 = scalar_lea.vmem %s2, %s245
      %p247 = pneg %p106
      %p248 = pneg %p103
      %p249 = scmp.lt.s32.totalorder %s19, 1
      %s250 = scalar_select %p249, %s19, 1
      %s251 = scalar_lea.vmem %s3, %s250
      %p252 = pneg %p132
      %p253 = pneg %p129
      %p254 = pneg %p160
      %p255 = pneg %p157
      %p256 = scmp.lt.s32.totalorder %s19, 1
      %s257 = scalar_select %p256, %s19, 1
      %p258 = scmp.lt.s32.totalorder %s20, 0
      %s259 = scalar_select %p258, %s20, 0
      %s260 = sadd.s32 %s259, %s257
      %s261 = smul.addr %s260, 8
      %s262 = scalar_lea.vmem %s4, %s261
      %p263 = scmp.lt.s32.totalorder %s19, 1
      %s264 = scalar_select %p263, %s19, 1
      %p265 = scmp.lt.s32.totalorder %s20, 0
      %s266 = scalar_select %p265, %s20, 0
      %s267 = sadd.s32 %s266, %s264
      %s268 = smul.addr %s267, 8
      %s269 = scalar_lea.vmem %s0, %s268
      %p270 = scmp.lt.s32.totalorder %s19, 1
      %s271 = scalar_select %p270, %s19, 1
      %p272 = scmp.lt.s32.totalorder %s20, 0
      %s273 = scalar_select %p272, %s20, 0
      %s274 = sadd.s32 %s273, %s271
      %s275 = smul.addr %s274, 8
      %s276 = scalar_lea.vmem %s1, %s275
      %p277 = scmp.lt.s32.totalorder %s19, 1
      %s278 = scalar_select %p277, %s19, 1
      %p279 = scmp.lt.s32.totalorder %s20, 0
      %s280 = scalar_select %p279, %s20, 0
      %s281 = sadd.s32 %s280, %s278
      %s282 = smul.addr %s281, 8
      %s283 = scalar_lea.vmem %s2, %s282
      %p284 = scmp.lt.s32.totalorder %s19, 1
      %s285 = scalar_select %p284, %s19, 1
      %s286 = scalar_lea.vmem %s3, %s285
      %p287 = scmp.lt.s32.totalorder %s19, 1
      %s288 = scalar_select %p287, %s19, 1
      %p289 = scmp.lt.s32.totalorder %s20, 0
      %s290 = scalar_select %p289, %s20, 0
      %s291 = sadd.s32 %s290, %s288
      %s292 = smul.addr %s291, 8
      %s293 = scalar_lea.vmem %s4, %s292
      %v294 = vld [vmem:[%s286] sm:$0x1]
      %v295 = vld [vmem:[%s269] sm:$0xff]
      %v296 = vld [vmem:[%s276] sm:$0xff]
      %v297 = vld [vmem:[%s283] sm:$0xff]
      %v298 = vmul.f32 %v295, 0.35355338
      %v300 = vlaneseq
      %v301 = vshrl.u32 %v300, 7
      %v302 = vsub.s32 0, %v301
      %v303 = vrot.slane %v294, %v302
      %vm305 = vcmask 64512
      %v307 = vsel %vm305, %v298, 0
      %v310 = vsel %vm305, %v296, 0
      %312 = vmatprep.subr.mxu0 0.0
      %313 = vmatpush1.xpose.msra.mxu0 0.0
      %314 = vmatprep.subr.mxu0 0.0
      %315 = vmatpush1.xpose.msra.mxu0 0.0
      %316 = vmatprep.subr.mxu0 0.0
      %317 = vmatpush1.xpose.msra.mxu0 0.0
      %318 = vmatprep.subr.mxu0 0.0
      %319 = vmatpush1.xpose.msra.mxu0 0.0
      %320 = vmatprep.subr.mxu0 0.0
      %321 = vmatpush1.xpose.msra.mxu0 0.0
      %322 = vmatprep.subr.mxu0 0.0
      %323 = vmatpush1.xpose.msra.mxu0 0.0
      %324 = vmatprep.subr.mxu0 0.0
      %325 = vmatpush1.xpose.msra.mxu0 0.0
      %326 = vmatprep.subr.mxu0 0.0
      %327 = vmatpush1.xpose.msra.mxu0 0.0
      %328 = vmatprep.subr.mxu0 0.0
      %329 = vmatpush1.xpose.msra.mxu0 0.0
      %330 = vmatprep.subr.mxu0 0.0
      %331 = vmatpush1.xpose.msra.mxu0 0.0
      %332 = vmatprep.subr.mxu0 0.0
      %333 = vmatpush1.xpose.msra.mxu0 0.0
      %334 = vmatprep.subr.mxu0 0.0
      %335 = vmatpush1.xpose.msra.mxu0 0.0
      %336 = vmatprep.subr.mxu0 0.0
      %337 = vmatpush1.xpose.msra.mxu0 0.0
      %338 = vmatprep.subr.mxu0 0.0
      %339 = vmatpush1.xpose.msra.mxu0 0.0
      %340 = vmatprep.subr.mxu0 0.0
      %341 = vmatpush1.xpose.msra.mxu0 0.0
      %342 = vmatprep.subr.mxu0 0.0
      %343 = vmatpush1.xpose.msra.mxu0 %v310
      %344 = vmatprep.subr.mxu0 0.0
      %345 = vmatpush2.xpose.msra.mxu0 0.0
      %346 = vmatprep.subr.mxu0 0.0
      %347 = vmatpush2.xpose.msra.mxu0 0.0
      %348 = vmatprep.subr.mxu0 0.0
      %349 = vmatpush2.xpose.msra.mxu0 0.0
      %350 = vmatprep.subr.mxu0 0.0
      %351 = vmatpush2.xpose.msra.mxu0 0.0
      %352 = vmatprep.subr.mxu0 0.0
      %353 = vmatpush2.xpose.msra.mxu0 0.0
      %354 = vmatprep.subr.mxu0 0.0
      %355 = vmatpush2.xpose.msra.mxu0 0.0
      %356 = vmatprep.subr.mxu0 0.0
      %357 = vmatpush2.xpose.msra.mxu0 0.0
      %358 = vmatprep.subr.mxu0 0.0
      %359 = vmatpush2.xpose.msra.mxu0 0.0
      %360 = vmatprep.subr.mxu0 0.0
      %361 = vmatpush2.xpose.msra.mxu0 0.0
      %362 = vmatprep.subr.mxu0 0.0
      %363 = vmatpush2.xpose.msra.mxu0 0.0
      %364 = vmatprep.subr.mxu0 0.0
      %365 = vmatpush2.xpose.msra.mxu0 0.0
      %366 = vmatprep.subr.mxu0 0.0
      %367 = vmatpush2.xpose.msra.mxu0 0.0
      %368 = vmatprep.subr.mxu0 0.0
      %369 = vmatpush2.xpose.msra.mxu0 0.0
      %370 = vmatprep.subr.mxu0 0.0
      %371 = vmatpush2.xpose.msra.mxu0 0.0
      %372 = vmatprep.subr.mxu0 0.0
      %373 = vmatpush2.xpose.msra.mxu0 0.0
      %374 = vmatprep.subr.mxu0 0.0
      %375 = vmatpush2.xpose.msra.mxu0 0.0
      %376 = vmatprep.mubr.f32.mxu0 0.0
      %377 = vmatmul.mubr.f32.gmra.mxu0 %v307
      %v378 = vpop.f32.mrf.mxu0
      %v379 = vadd.f32 %v303, %v378
      %v380 = vpop.f32.mrf.mxu0
      %381 = vdwg.mxu0
      %v382 = vsel %vm305, %v379, -inf
      %383 = vmax.xlane.f32.xlu0 %v382
      %v384 = vpop.xlane.xlu0 %383
      %v385 = vsub.f32 %v379, %v384
      %v386 = vmul.f32 %v385, 1.442695
      %v387 = vpow.pop %v386
      %v388 = vsel %vm305, %v387, 0.0
      %389 = vadd.xlane.f32.xlu0 %v388
      %v390 = vpop.xlane.xlu0 %389
      %v392 = vsel %vm305, %v387, 0
      %394 = vmatprep.subr.mxu0 0.0
      %395 = vmatpush1.msra.mxu0 0.0
      %396 = vmatprep.subr.mxu0 0.0
      %397 = vmatpush1.msra.mxu0 0.0
      %398 = vmatprep.subr.mxu0 0.0
      %399 = vmatpush1.msra.mxu0 0.0
      %400 = vmatprep.subr.mxu0 0.0
      %401 = vmatpush1.msra.mxu0 0.0
      %402 = vmatprep.subr.mxu0 0.0
      %403 = vmatpush1.msra.mxu0 0.0
      %404 = vmatprep.subr.mxu0 0.0
      %405 = vmatpush1.msra.mxu0 0.0
      %406 = vmatprep.subr.mxu0 0.0
      %407 = vmatpush1.msra.mxu0 0.0
      %408 = vmatprep.subr.mxu0 0.0
      %409 = vmatpush1.msra.mxu0 0.0
      %410 = vmatprep.subr.mxu0 0.0
      %411 = vmatpush1.msra.mxu0 0.0
      %412 = vmatprep.subr.mxu0 0.0
      %413 = vmatpush1.msra.mxu0 0.0
      %414 = vmatprep.subr.mxu0 0.0
      %415 = vmatpush1.msra.mxu0 0.0
      %416 = vmatprep.subr.mxu0 0.0
      %417 = vmatpush1.msra.mxu0 0.0
      %418 = vmatprep.subr.mxu0 0.0
      %419 = vmatpush1.msra.mxu0 0.0
      %420 = vmatprep.subr.mxu0 0.0
      %421 = vmatpush1.msra.mxu0 0.0
      %422 = vmatprep.subr.mxu0 0.0
      %423 = vmatpush1.msra.mxu0 0.0
      %424 = vmatprep.subr.mxu0 0.0
      %425 = vmatpush1.msra.mxu0 %v297
      %426 = vmatprep.subr.mxu0 0.0
      %427 = vmatpush2.msra.mxu0 0.0
      %428 = vmatprep.subr.mxu0 0.0
      %429 = vmatpush2.msra.mxu0 0.0
      %430 = vmatprep.subr.mxu0 0.0
      %431 = vmatpush2.msra.mxu0 0.0
      %432 = vmatprep.subr.mxu0 0.0
      %433 = vmatpush2.msra.mxu0 0.0
      %434 = vmatprep.subr.mxu0 0.0
      %435 = vmatpush2.msra.mxu0 0.0
      %436 = vmatprep.subr.mxu0 0.0
      %437 = vmatpush2.msra.mxu0 0.0
      %438 = vmatprep.subr.mxu0 0.0
      %439 = vmatpush2.msra.mxu0 0.0
      %440 = vmatprep.subr.mxu0 0.0
      %441 = vmatpush2.msra.mxu0 0.0
      %442 = vmatprep.subr.mxu0 0.0
      %443 = vmatpush2.msra.mxu0 0.0
      %444 = vmatprep.subr.mxu0 0.0
      %445 = vmatpush2.msra.mxu0 0.0
      %446 = vmatprep.subr.mxu0 0.0
      %447 = vmatpush2.msra.mxu0 0.0
      %448 = vmatprep.subr.mxu0 0.0
      %449 = vmatpush2.msra.mxu0 0.0
      %450 = vmatprep.subr.mxu0 0.0
      %451 = vmatpush2.msra.mxu0 0.0
      %452 = vmatprep.subr.mxu0 0.0
      %453 = vmatpush2.msra.mxu0 0.0
      %454 = vmatprep.subr.mxu0 0.0
      %455 = vmatpush2.msra.mxu0 0.0
      %456 = vmatprep.subr.mxu0 0.0
      %457 = vmatpush2.msra.mxu0 0.0
      %458 = vmatprep.mubr.f32.mxu0 0.0
      %459 = vmatmul.mubr.f32.gmra.mxu0 %v392
      %v460 = vpop.f32.mrf.mxu0
      %v461 = vadd.f32 0.0, %v460
      %v462 = vpop.f32.mrf.mxu0
      %463 = vdwg.mxu0
      %v464 = vrcp.pop %v390
      %v465 = vmul.f32 %v461, %v464
      %466 = vrot.lane.b32.xlu0 %v298, 120
      %v467 = vpop.permute.xlu0 %466
      %468 = vrot.lane.b32.xlu0 %v296, 120
      %v469 = vpop.permute.xlu0 %468
      %v470 = vsel %vm305, %v467, 0
      %v472 = vsel %vm305, %v469, 0
      %474 = vmatprep.subr.mxu0 0.0
      %475 = vmatpush1.xpose.msra.mxu0 0.0
      %476 = vmatprep.subr.mxu0 0.0
      %477 = vmatpush1.xpose.msra.mxu0 0.0
      %478 = vmatprep.subr.mxu0 0.0
      %479 = vmatpush1.xpose.msra.mxu0 0.0
      %480 = vmatprep.subr.mxu0 0.0
      %481 = vmatpush1.xpose.msra.mxu0 0.0
      %482 = vmatprep.subr.mxu0 0.0
      %483 = vmatpush1.xpose.msra.mxu0 0.0
      %484 = vmatprep.subr.mxu0 0.0
      %485 = vmatpush1.xpose.msra.mxu0 0.0
      %486 = vmatprep.subr.mxu0 0.0
      %487 = vmatpush1.xpose.msra.mxu0 0.0
      %488 = vmatprep.subr.mxu0 0.0
      %489 = vmatpush1.xpose.msra.mxu0 0.0
      %490 = vmatprep.subr.mxu0 0.0
      %491 = vmatpush1.xpose.msra.mxu0 0.0
      %492 = vmatprep.subr.mxu0 0.0
      %493 = vmatpush1.xpose.msra.mxu0 0.0
      %494 = vmatprep.subr.mxu0 0.0
      %495 = vmatpush1.xpose.msra.mxu0 0.0
      %496 = vmatprep.subr.mxu0 0.0
      %497 = vmatpush1.xpose.msra.mxu0 0.0
      %498 = vmatprep.subr.mxu0 0.0
      %499 = vmatpush1.xpose.msra.mxu0 0.0
      %500 = vmatprep.subr.mxu0 0.0
      %501 = vmatpush1.xpose.msra.mxu0 0.0
      %502 = vmatprep.subr.mxu0 0.0
      %503 = vmatpush1.xpose.msra.mxu0 0.0
      %504 = vmatprep.subr.mxu0 0.0
      %505 = vmatpush1.xpose.msra.mxu0 %v472
      %506 = vmatprep.subr.mxu0 0.0
      %507 = vmatpush2.xpose.msra.mxu0 0.0
      %508 = vmatprep.subr.mxu0 0.0
      %509 = vmatpush2.xpose.msra.mxu0 0.0
      %510 = vmatprep.subr.mxu0 0.0
      %511 = vmatpush2.xpose.msra.mxu0 0.0
      %512 = vmatprep.subr.mxu0 0.0
      %513 = vmatpush2.xpose.msra.mxu0 0.0
      %514 = vmatprep.subr.mxu0 0.0
      %515 = vmatpush2.xpose.msra.mxu0 0.0
      %516 = vmatprep.subr.mxu0 0.0
      %517 = vmatpush2.xpose.msra.mxu0 0.0
      %518 = vmatprep.subr.mxu0 0.0
      %519 = vmatpush2.xpose.msra.mxu0 0.0
      %520 = vmatprep.subr.mxu0 0.0
      %521 = vmatpush2.xpose.msra.mxu0 0.0
      %522 = vmatprep.subr.mxu0 0.0
      %523 = vmatpush2.xpose.msra.mxu0 0.0
      %524 = vmatprep.subr.mxu0 0.0
      %525 = vmatpush2.xpose.msra.mxu0 0.0
      %526 = vmatprep.subr.mxu0 0.0
      %527 = vmatpush2.xpose.msra.mxu0 0.0
      %528 = vmatprep.subr.mxu0 0.0
      %529 = vmatpush2.xpose.msra.mxu0 0.0
      %530 = vmatprep.subr.mxu0 0.0
      %531 = vmatpush2.xpose.msra.mxu0 0.0
      %532 = vmatprep.subr.mxu0 0.0
      %533 = vmatpush2.xpose.msra.mxu0 0.0
      %534 = vmatprep.subr.mxu0 0.0
      %535 = vmatpush2.xpose.msra.mxu0 0.0
      %536 = vmatprep.subr.mxu0 0.0
      %537 = vmatpush2.xpose.msra.mxu0 0.0
      %538 = vmatprep.mubr.f32.mxu0 0.0
      %539 = vmatmul.mubr.f32.gmra.mxu0 %v470
      %v540 = vpop.f32.mrf.mxu0
      %v541 = vadd.f32 %v303, %v540
      %v542 = vpop.f32.mrf.mxu0
      %543 = vdwg.mxu0
      %v544 = vsel %vm305, %v541, -inf
      %545 = vmax.xlane.f32.xlu0 %v544
      %v546 = vpop.xlane.xlu0 %545
      %v547 = vsub.f32 %v541, %v546
      %v548 = vmul.f32 %v547, 1.442695
      %v549 = vpow.pop %v548
      %v550 = vsel %vm305, %v549, 0.0
      %551 = vadd.xlane.f32.xlu0 %v550
      %v552 = vpop.xlane.xlu0 %551
      %554 = vrot.lane.b32.xlu0 %v297, 120
      %v555 = vpop.permute.xlu0 %554
      %v558 = vsel %vm305, %v549, 0
      %560 = vmatprep.subr.mxu0 0.0
      %561 = vmatpush1.msra.mxu0 0.0
      %562 = vmatprep.subr.mxu0 0.0
      %563 = vmatpush1.msra.mxu0 0.0
      %564 = vmatprep.subr.mxu0 0.0
      %565 = vmatpush1.msra.mxu0 0.0
      %566 = vmatprep.subr.mxu0 0.0
      %567 = vmatpush1.msra.mxu0 0.0
      %568 = vmatprep.subr.mxu0 0.0
      %569 = vmatpush1.msra.mxu0 0.0
      %570 = vmatprep.subr.mxu0 0.0
      %571 = vmatpush1.msra.mxu0 0.0
      %572 = vmatprep.subr.mxu0 0.0
      %573 = vmatpush1.msra.mxu0 0.0
      %574 = vmatprep.subr.mxu0 0.0
      %575 = vmatpush1.msra.mxu0 0.0
      %576 = vmatprep.subr.mxu0 0.0
      %577 = vmatpush1.msra.mxu0 0.0
      %578 = vmatprep.subr.mxu0 0.0
      %579 = vmatpush1.msra.mxu0 0.0
      %580 = vmatprep.subr.mxu0 0.0
      %581 = vmatpush1.msra.mxu0 0.0
      %582 = vmatprep.subr.mxu0 0.0
      %583 = vmatpush1.msra.mxu0 0.0
      %584 = vmatprep.subr.mxu0 0.0
      %585 = vmatpush1.msra.mxu0 0.0
      %586 = vmatprep.subr.mxu0 0.0
      %587 = vmatpush1.msra.mxu0 0.0
      %588 = vmatprep.subr.mxu0 0.0
      %589 = vmatpush1.msra.mxu0 0.0
      %590 = vmatprep.subr.mxu0 0.0
      %591 = vmatpush1.msra.mxu0 %v555
      %592 = vmatprep.subr.mxu0 0.0
      %593 = vmatpush2.msra.mxu0 0.0
      %594 = vmatprep.subr.mxu0 0.0
      %595 = vmatpush2.msra.mxu0 0.0
      %596 = vmatprep.subr.mxu0 0.0
      %597 = vmatpush2.msra.mxu0 0.0
      %598 = vmatprep.subr.mxu0 0.0
      %599 = vmatpush2.msra.mxu0 0.0
      %600 = vmatprep.subr.mxu0 0.0
      %601 = vmatpush2.msra.mxu0 0.0
      %602 = vmatprep.subr.mxu0 0.0
      %603 = vmatpush2.msra.mxu0 0.0
      %604 = vmatprep.subr.mxu0 0.0
      %605 = vmatpush2.msra.mxu0 0.0
      %606 = vmatprep.subr.mxu0 0.0
      %607 = vmatpush2.msra.mxu0 0.0
      %608 = vmatprep.subr.mxu0 0.0
      %609 = vmatpush2.msra.mxu0 0.0
      %610 = vmatprep.subr.mxu0 0.0
      %611 = vmatpush2.msra.mxu0 0.0
      %612 = vmatprep.subr.mxu0 0.0
      %613 = vmatpush2.msra.mxu0 0.0
      %614 = vmatprep.subr.mxu0 0.0
      %615 = vmatpush2.msra.mxu0 0.0
      %616 = vmatprep.subr.mxu0 0.0
      %617 = vmatpush2.msra.mxu0 0.0
      %618 = vmatprep.subr.mxu0 0.0
      %619 = vmatpush2.msra.mxu0 0.0
      %620 = vmatprep.subr.mxu0 0.0
      %621 = vmatpush2.msra.mxu0 0.0
      %622 = vmatprep.subr.mxu0 0.0
      %623 = vmatpush2.msra.mxu0 0.0
      %624 = vmatprep.mubr.f32.mxu0 0.0
      %625 = vmatmul.mubr.f32.gmra.mxu0 %v558
      %v626 = vpop.f32.mrf.mxu0
      %v627 = vadd.f32 0.0, %v626
      %v628 = vpop.f32.mrf.mxu0
      %629 = vdwg.mxu0
      %v630 = vrcp.pop %v552
      %v631 = vmul.f32 %v627, %v630
      %632 = vrot.lane.b32.xlu0 %v298, 112
      %v633 = vpop.permute.xlu0 %632
      %634 = vrot.lane.b32.xlu0 %v296, 112
      %v635 = vpop.permute.xlu0 %634
      %v636 = vsel %vm305, %v633, 0
      %v638 = vsel %vm305, %v635, 0
      %640 = vmatprep.subr.mxu0 0.0
      %641 = vmatpush1.xpose.msra.mxu0 0.0
      %642 = vmatprep.subr.mxu0 0.0
      %643 = vmatpush1.xpose.msra.mxu0 0.0
      %644 = vmatprep.subr.mxu0 0.0
      %645 = vmatpush1.xpose.msra.mxu0 0.0
      %646 = vmatprep.subr.mxu0 0.0
      %647 = vmatpush1.xpose.msra.mxu0 0.0
      %648 = vmatprep.subr.mxu0 0.0
      %649 = vmatpush1.xpose.msra.mxu0 0.0
      %650 = vmatprep.subr.mxu0 0.0
      %651 = vmatpush1.xpose.msra.mxu0 0.0
      %652 = vmatprep.subr.mxu0 0.0
      %653 = vmatpush1.xpose.msra.mxu0 0.0
      %654 = vmatprep.subr.mxu0 0.0
      %655 = vmatpush1.xpose.msra.mxu0 0.0
      %656 = vmatprep.subr.mxu0 0.0
      %657 = vmatpush1.xpose.msra.mxu0 0.0
      %658 = vmatprep.subr.mxu0 0.0
      %659 = vmatpush1.xpose.msra.mxu0 0.0
      %660 = vmatprep.subr.mxu0 0.0
      %661 = vmatpush1.xpose.msra.mxu0 0.0
      %662 = vmatprep.subr.mxu0 0.0
      %663 = vmatpush1.xpose.msra.mxu0 0.0
      %664 = vmatprep.subr.mxu0 0.0
      %665 = vmatpush1.xpose.msra.mxu0 0.0
      %666 = vmatprep.subr.mxu0 0.0
      %667 = vmatpush1.xpose.msra.mxu0 0.0
      %668 = vmatprep.subr.mxu0 0.0
      %669 = vmatpush1.xpose.msra.mxu0 0.0
      %670 = vmatprep.subr.mxu0 0.0
      %671 = vmatpush1.xpose.msra.mxu0 %v638
      %672 = vmatprep.subr.mxu0 0.0
      %673 = vmatpush2.xpose.msra.mxu0 0.0
      %674 = vmatprep.subr.mxu0 0.0
      %675 = vmatpush2.xpose.msra.mxu0 0.0
      %676 = vmatprep.subr.mxu0 0.0
      %677 = vmatpush2.xpose.msra.mxu0 0.0
      %678 = vmatprep.subr.mxu0 0.0
      %679 = vmatpush2.xpose.msra.mxu0 0.0
      %680 = vmatprep.subr.mxu0 0.0
      %681 = vmatpush2.xpose.msra.mxu0 0.0
      %682 = vmatprep.subr.mxu0 0.0
      %683 = vmatpush2.xpose.msra.mxu0 0.0
      %684 = vmatprep.subr.mxu0 0.0
      %685 = vmatpush2.xpose.msra.mxu0 0.0
      %686 = vmatprep.subr.mxu0 0.0
      %687 = vmatpush2.xpose.msra.mxu0 0.0
      %688 = vmatprep.subr.mxu0 0.0
      %689 = vmatpush2.xpose.msra.mxu0 0.0
      %690 = vmatprep.subr.mxu0 0.0
      %691 = vmatpush2.xpose.msra.mxu0 0.0
      %692 = vmatprep.subr.mxu0 0.0
      %693 = vmatpush2.xpose.msra.mxu0 0.0
      %694 = vmatprep.subr.mxu0 0.0
      %695 = vmatpush2.xpose.msra.mxu0 0.0
      %696 = vmatprep.subr.mxu0 0.0
      %697 = vmatpush2.xpose.msra.mxu0 0.0
      %698 = vmatprep.subr.mxu0 0.0
      %699 = vmatpush2.xpose.msra.mxu0 0.0
      %700 = vmatprep.subr.mxu0 0.0
      %701 = vmatpush2.xpose.msra.mxu0 0.0
      %702 = vmatprep.subr.mxu0 0.0
      %703 = vmatpush2.xpose.msra.mxu0 0.0
      %704 = vmatprep.mubr.f32.mxu0 0.0
      %705 = vmatmul.mubr.f32.gmra.mxu0 %v636
      %v706 = vpop.f32.mrf.mxu0
      %v707 = vadd.f32 %v303, %v706
      %v708 = vpop.f32.mrf.mxu0
      %709 = vdwg.mxu0
      %v710 = vsel %vm305, %v707, -inf
      %711 = vmax.xlane.f32.xlu0 %v710
      %v712 = vpop.xlane.xlu0 %711
      %v713 = vsub.f32 %v707, %v712
      %v714 = vmul.f32 %v713, 1.442695
      %v715 = vpow.pop %v714
      %v716 = vsel %vm305, %v715, 0.0
      %717 = vadd.xlane.f32.xlu0 %v716
      %v718 = vpop.xlane.xlu0 %717
      %719 = vrot.lane.b32.xlu0 %v297, 112
      %v720 = vpop.permute.xlu0 %719
      %v723 = vsel %vm305, %v715, 0
      %725 = vmatprep.subr.mxu0 0.0
      %726 = vmatpush1.msra.mxu0 0.0
      %727 = vmatprep.subr.mxu0 0.0
      %728 = vmatpush1.msra.mxu0 0.0
      %729 = vmatprep.subr.mxu0 0.0
      %730 = vmatpush1.msra.mxu0 0.0
      %731 = vmatprep.subr.mxu0 0.0
      %732 = vmatpush1.msra.mxu0 0.0
      %733 = vmatprep.subr.mxu0 0.0
      %734 = vmatpush1.msra.mxu0 0.0
      %735 = vmatprep.subr.mxu0 0.0
      %736 = vmatpush1.msra.mxu0 0.0
      %737 = vmatprep.subr.mxu0 0.0
      %738 = vmatpush1.msra.mxu0 0.0
      %739 = vmatprep.subr.mxu0 0.0
      %740 = vmatpush1.msra.mxu0 0.0
      %741 = vmatprep.subr.mxu0 0.0
      %742 = vmatpush1.msra.mxu0 0.0
      %743 = vmatprep.subr.mxu0 0.0
      %744 = vmatpush1.msra.mxu0 0.0
      %745 = vmatprep.subr.mxu0 0.0
      %746 = vmatpush1.msra.mxu0 0.0
      %747 = vmatprep.subr.mxu0 0.0
      %748 = vmatpush1.msra.mxu0 0.0
      %749 = vmatprep.subr.mxu0 0.0
      %750 = vmatpush1.msra.mxu0 0.0
      %751 = vmatprep.subr.mxu0 0.0
      %752 = vmatpush1.msra.mxu0 0.0
      %753 = vmatprep.subr.mxu0 0.0
      %754 = vmatpush1.msra.mxu0 0.0
      %755 = vmatprep.subr.mxu0 0.0
      %756 = vmatpush1.msra.mxu0 %v720
      %757 = vmatprep.subr.mxu0 0.0
      %758 = vmatpush2.msra.mxu0 0.0
      %759 = vmatprep.subr.mxu0 0.0
      %760 = vmatpush2.msra.mxu0 0.0
      %761 = vmatprep.subr.mxu0 0.0
      %762 = vmatpush2.msra.mxu0 0.0
      %763 = vmatprep.subr.mxu0 0.0
      %764 = vmatpush2.msra.mxu0 0.0
      %765 = vmatprep.subr.mxu0 0.0
      %766 = vmatpush2.msra.mxu0 0.0
      %767 = vmatprep.subr.mxu0 0.0
      %768 = vmatpush2.msra.mxu0 0.0
      %769 = vmatprep.subr.mxu0 0.0
      %770 = vmatpush2.msra.mxu0 0.0
      %771 = vmatprep.subr.mxu0 0.0
      %772 = vmatpush2.msra.mxu0 0.0
      %773 = vmatprep.subr.mxu0 0.0
      %774 = vmatpush2.msra.mxu0 0.0
      %775 = vmatprep.subr.mxu0 0.0
      %776 = vmatpush2.msra.mxu0 0.0
      %777 = vmatprep.subr.mxu0 0.0
      %778 = vmatpush2.msra.mxu0 0.0
      %779 = vmatprep.subr.mxu0 0.0
      %780 = vmatpush2.msra.mxu0 0.0
      %781 = vmatprep.subr.mxu0 0.0
      %782 = vmatpush2.msra.mxu0 0.0
      %783 = vmatprep.subr.mxu0 0.0
      %784 = vmatpush2.msra.mxu0 0.0
      %785 = vmatprep.subr.mxu0 0.0
      %786 = vmatpush2.msra.mxu0 0.0
      %787 = vmatprep.subr.mxu0 0.0
      %788 = vmatpush2.msra.mxu0 0.0
      %789 = vmatprep.mubr.f32.mxu0 0.0
      %790 = vmatmul.mubr.f32.gmra.mxu0 %v723
      %v791 = vpop.f32.mrf.mxu0
      %v792 = vadd.f32 0.0, %v791
      %v793 = vpop.f32.mrf.mxu0
      %794 = vdwg.mxu0
      %v795 = vrcp.pop %v718
      %v796 = vmul.f32 %v792, %v795
      %797 = vrot.lane.b32.xlu0 %v298, 104
      %v798 = vpop.permute.xlu0 %797
      %799 = vrot.lane.b32.xlu0 %v296, 104
      %v800 = vpop.permute.xlu0 %799
      %v801 = vsel %vm305, %v798, 0
      %v803 = vsel %vm305, %v800, 0
      %805 = vmatprep.subr.mxu0 0.0
      %806 = vmatpush1.xpose.msra.mxu0 0.0
      %807 = vmatprep.subr.mxu0 0.0
      %808 = vmatpush1.xpose.msra.mxu0 0.0
      %809 = vmatprep.subr.mxu0 0.0
      %810 = vmatpush1.xpose.msra.mxu0 0.0
      %811 = vmatprep.subr.mxu0 0.0
      %812 = vmatpush1.xpose.msra.mxu0 0.0
      %813 = vmatprep.subr.mxu0 0.0
      %814 = vmatpush1.xpose.msra.mxu0 0.0
      %815 = vmatprep.subr.mxu0 0.0
      %816 = vmatpush1.xpose.msra.mxu0 0.0
      %817 = vmatprep.subr.mxu0 0.0
      %818 = vmatpush1.xpose.msra.mxu0 0.0
      %819 = vmatprep.subr.mxu0 0.0
      %820 = vmatpush1.xpose.msra.mxu0 0.0
      %821 = vmatprep.subr.mxu0 0.0
      %822 = vmatpush1.xpose.msra.mxu0 0.0
      %823 = vmatprep.subr.mxu0 0.0
      %824 = vmatpush1.xpose.msra.mxu0 0.0
      %825 = vmatprep.subr.mxu0 0.0
      %826 = vmatpush1.xpose.msra.mxu0 0.0
      %827 = vmatprep.subr.mxu0 0.0
      %828 = vmatpush1.xpose.msra.mxu0 0.0
      %829 = vmatprep.subr.mxu0 0.0
      %830 = vmatpush1.xpose.msra.mxu0 0.0
      %831 = vmatprep.subr.mxu0 0.0
      %832 = vmatpush1.xpose.msra.mxu0 0.0
      %833 = vmatprep.subr.mxu0 0.0
      %834 = vmatpush1.xpose.msra.mxu0 0.0
      %835 = vmatprep.subr.mxu0 0.0
      %836 = vmatpush1.xpose.msra.mxu0 %v803
      %837 = vmatprep.subr.mxu0 0.0
      %838 = vmatpush2.xpose.msra.mxu0 0.0
      %839 = vmatprep.subr.mxu0 0.0
      %840 = vmatpush2.xpose.msra.mxu0 0.0
      %841 = vmatprep.subr.mxu0 0.0
      %842 = vmatpush2.xpose.msra.mxu0 0.0
      %843 = vmatprep.subr.mxu0 0.0
      %844 = vmatpush2.xpose.msra.mxu0 0.0
      %845 = vmatprep.subr.mxu0 0.0
      %846 = vmatpush2.xpose.msra.mxu0 0.0
      %847 = vmatprep.subr.mxu0 0.0
      %848 = vmatpush2.xpose.msra.mxu0 0.0
      %849 = vmatprep.subr.mxu0 0.0
      %850 = vmatpush2.xpose.msra.mxu0 0.0
      %851 = vmatprep.subr.mxu0 0.0
      %852 = vmatpush2.xpose.msra.mxu0 0.0
      %853 = vmatprep.subr.mxu0 0.0
      %854 = vmatpush2.xpose.msra.mxu0 0.0
      %855 = vmatprep.subr.mxu0 0.0
      %856 = vmatpush2.xpose.msra.mxu0 0.0
      %857 = vmatprep.subr.mxu0 0.0
      %858 = vmatpush2.xpose.msra.mxu0 0.0
      %859 = vmatprep.subr.mxu0 0.0
      %860 = vmatpush2.xpose.msra.mxu0 0.0
      %861 = vmatprep.subr.mxu0 0.0
      %862 = vmatpush2.xpose.msra.mxu0 0.0
      %863 = vmatprep.subr.mxu0 0.0
      %864 = vmatpush2.xpose.msra.mxu0 0.0
      %865 = vmatprep.subr.mxu0 0.0
      %866 = vmatpush2.xpose.msra.mxu0 0.0
      %867 = vmatprep.subr.mxu0 0.0
      %868 = vmatpush2.xpose.msra.mxu0 0.0
      %869 = vmatprep.mubr.f32.mxu0 0.0
      %870 = vmatmul.mubr.f32.gmra.mxu0 %v801
      %v871 = vpop.f32.mrf.mxu0
      %v872 = vadd.f32 %v303, %v871
      %v873 = vpop.f32.mrf.mxu0
      %874 = vdwg.mxu0
      %v875 = vsel %vm305, %v872, -inf
      %876 = vmax.xlane.f32.xlu0 %v875
      %v877 = vpop.xlane.xlu0 %876
      %v878 = vsub.f32 %v872, %v877
      %v879 = vmul.f32 %v878, 1.442695
      %v880 = vpow.pop %v879
      %v881 = vsel %vm305, %v880, 0.0
      %882 = vadd.xlane.f32.xlu0 %v881
      %v883 = vpop.xlane.xlu0 %882
      %884 = vrot.lane.b32.xlu0 %v297, 104
      %v885 = vpop.permute.xlu0 %884
      %v888 = vsel %vm305, %v880, 0
      %890 = vmatprep.subr.mxu0 0.0
      %891 = vmatpush1.msra.mxu0 0.0
      %892 = vmatprep.subr.mxu0 0.0
      %893 = vmatpush1.msra.mxu0 0.0
      %894 = vmatprep.subr.mxu0 0.0
      %895 = vmatpush1.msra.mxu0 0.0
      %896 = vmatprep.subr.mxu0 0.0
      %897 = vmatpush1.msra.mxu0 0.0
      %898 = vmatprep.subr.mxu0 0.0
      %899 = vmatpush1.msra.mxu0 0.0
      %900 = vmatprep.subr.mxu0 0.0
      %901 = vmatpush1.msra.mxu0 0.0
      %902 = vmatprep.subr.mxu0 0.0
      %903 = vmatpush1.msra.mxu0 0.0
      %904 = vmatprep.subr.mxu0 0.0
      %905 = vmatpush1.msra.mxu0 0.0
      %906 = vmatprep.subr.mxu0 0.0
      %907 = vmatpush1.msra.mxu0 0.0
      %908 = vmatprep.subr.mxu0 0.0
      %909 = vmatpush1.msra.mxu0 0.0
      %910 = vmatprep.subr.mxu0 0.0
      %911 = vmatpush1.msra.mxu0 0.0
      %912 = vmatprep.subr.mxu0 0.0
      %913 = vmatpush1.msra.mxu0 0.0
      %914 = vmatprep.subr.mxu0 0.0
      %915 = vmatpush1.msra.mxu0 0.0
      %916 = vmatprep.subr.mxu0 0.0
      %917 = vmatpush1.msra.mxu0 0.0
      %918 = vmatprep.subr.mxu0 0.0
      %919 = vmatpush1.msra.mxu0 0.0
      %920 = vmatprep.subr.mxu0 0.0
      %921 = vmatpush1.msra.mxu0 %v885
      %922 = vmatprep.subr.mxu0 0.0
      %923 = vmatpush2.msra.mxu0 0.0
      %924 = vmatprep.subr.mxu0 0.0
      %925 = vmatpush2.msra.mxu0 0.0
      %926 = vmatprep.subr.mxu0 0.0
      %927 = vmatpush2.msra.mxu0 0.0
      %928 = vmatprep.subr.mxu0 0.0
      %929 = vmatpush2.msra.mxu0 0.0
      %930 = vmatprep.subr.mxu0 0.0
      %931 = vmatpush2.msra.mxu0 0.0
      %932 = vmatprep.subr.mxu0 0.0
      %933 = vmatpush2.msra.mxu0 0.0
      %934 = vmatprep.subr.mxu0 0.0
      %935 = vmatpush2.msra.mxu0 0.0
      %936 = vmatprep.subr.mxu0 0.0
      %937 = vmatpush2.msra.mxu0 0.0
      %938 = vmatprep.subr.mxu0 0.0
      %939 = vmatpush2.msra.mxu0 0.0
      %940 = vmatprep.subr.mxu0 0.0
      %941 = vmatpush2.msra.mxu0 0.0
      %942 = vmatprep.subr.mxu0 0.0
      %943 = vmatpush2.msra.mxu0 0.0
      %944 = vmatprep.subr.mxu0 0.0
      %945 = vmatpush2.msra.mxu0 0.0
      %946 = vmatprep.subr.mxu0 0.0
      %947 = vmatpush2.msra.mxu0 0.0
      %948 = vmatprep.subr.mxu0 0.0
      %949 = vmatpush2.msra.mxu0 0.0
      %950 = vmatprep.subr.mxu0 0.0
      %951 = vmatpush2.msra.mxu0 0.0
      %952 = vmatprep.subr.mxu0 0.0
      %953 = vmatpush2.msra.mxu0 0.0
      %954 = vmatprep.mubr.f32.mxu0 0.0
      %955 = vmatmul.mubr.f32.gmra.mxu0 %v888
      %v956 = vpop.f32.mrf.mxu0
      %v957 = vadd.f32 0.0, %v956
      %v958 = vpop.f32.mrf.mxu0
      %959 = vdwg.mxu0
      %v960 = vrcp.pop %v883
      %v961 = vmul.f32 %v957, %v960
      %963 = vrot.lane.b32.xlu0 %v631, 8
      %v964 = vpop.permute.xlu0 %963
      %967 = vrot.lane.b32.xlu0 %v796, 16
      %v968 = vpop.permute.xlu0 %967
      %971 = vrot.lane.b32.xlu0 %v961, 24
      %v972 = vpop.permute.xlu0 %971
      %v974 = vsel %vm305, %v465, %v964
      %vm975 = vcmask 130048
      %v976 = vsel %vm975, %v974, %v968
      %vm977 = vcmask 195584
      %v978 = vsel %vm977, %v976, %v972
      %vm979 = vcmask 261120
      %980 = vst.msk [vmem:[%s293] sm:$0xff] %vm979, %v978
      %p981 = scmp.lt.s32.totalorder %s19, 1
      %s982 = scalar_select %p981, %s19, 1
      %p983 = scmp.lt.s32.totalorder %s20, 0
      %s984 = scalar_select %p983, %s20, 0
      %s985 = sadd.s32 %s984, %s982
      %s986 = smul.addr %s985, 8
      %s987 = scalar_lea.vmem %s4, %s986
      // Predicated region
      $region37: #{bert_layer.5} parent=35 // pred_check
        %p988 = pneg %p157
      $region38: #{bert_layer.5} parent=35 // pred_check_branch
        %990 = sbr.rel (%p988) target = $region40
      $region39: #{bert_layer.5} parent=35 // pred_region
        _
      $region40: #{bert_layer.5} parent=35 // pred_fallthru
        _
    $region36: #{bert_layer.5} parent=5 // pred_fallthru
      _
    %p991 = scmp.le.s32.totalorder 2, %s10
    // Predicated region
    $region41: #{bert_layer.5} parent=5 // pred_check
      %p992 = pneg %p991
    $region42: #{bert_layer.5} parent=5 // pred_check_branch
      %994 = sbr.rel (%p992) target = $region44
    $region43: #{bert_layer.5} parent=5 // pred_region
      %s995 = ssub.s32 %s10, 2
      // Predicated region
      $region45: #{bert_layer.5} parent=43 // pred_check
        %p996 = pneg %p163
      $region46: #{bert_layer.5} parent=43 // pred_check_branch
        %998 = sbr.rel (%p996) target = $region48
      $region47: #{bert_layer.5} parent=43 // pred_region
        %p999 = scmp.lt.s32.totalorder %s21, 1
        %s1000 = scalar_select %p999, %s21, 1
        %p1001 = scmp.lt.s32.totalorder %s22, 0
        %s1002 = scalar_select %p1001, %s22, 0
        %s1003 = sadd.s32 %s1002, %s1000
        %s1004 = smul.addr %s1003, 8
        %s1005 = scalar_lea.vmem %s4, %s1004
      $region48: #{bert_layer.5} parent=43 // pred_fallthru
        _
    $region44: #{bert_layer.5} parent=5 // pred_fallthru
      _
  $region6: #{bert_layer.5} parent=0 // loop_footer
    %s14 = sadd.s32 1, %s10
  $region7: #{bert_layer.5} parent=0 // loop_footer_branch
    %9 = sbr.rel target = $region3
  $region8: #{bert_layer.5} parent=0 // loop_exit
    _

</llo_original>
